<compile_context>
chip_gen: v7x
topology: tpu7x:2x2x1
jax: 0.10.0
libtpu: 0.0.40
codegen_flags: <defaults>
</compile_context>

<pallas_src>
import jax
import jax.numpy as jnp
from jax import lax
from jax.experimental import pallas as pl
from jax.experimental.pallas import tpu as pltpu

LANES = 128


def _round_up(x, m):
    return ((x + m - 1) // m) * m


def _vmem_capacity_bytes():
    # Generation-aware VMEM capacity (v7x: 64 MiB/TC, v5e/v6e: 128 MiB).
    try:
        return int(pltpu.get_tpu_info().vmem_capacity_bytes)
    except Exception:
        return 64 * 1024 * 1024  # conservative (v7x per-TensorCore)


def conv2x2_fused_kernel(x_ref, w_ref, b_ref, o_ref, xpad_ref, col_ref):
    # x_ref   : (nb, H, W, C1)       VMEM, native dtype, nb batch elements
    # w_ref   : (9*C1, C2p)          VMEM, effective 3x3 weights, compute dtype
    # b_ref   : (1, C2p)             VMEM, f32, 4*bias (lane-padded)
    # o_ref   : (nb*H*W, C2p)        VMEM, flattened-pixel x channel output (lane-dense)
    # xpad_ref: (H+2, W+2, C1)       VMEM scratch, zero-padded image, compute dtype
    # col_ref : (nb*H*W, 9*C1)       VMEM scratch, im2col patch matrix, compute dtype
    nb, H, W, C1 = x_ref.shape
    HW = H * W

    # Zero only the 1-element halo ring; the interior is fully overwritten below.
    # (Not gated on program_id: with "parallel" semantics each core must
    #  initialize its own scratch.)
    zrow = jnp.zeros((1, W + 2, C1), xpad_ref.dtype)
    zcol = jnp.zeros((H + 2, 1, C1), xpad_ref.dtype)
    xpad_ref[0:1, :, :] = zrow
    xpad_ref[H + 1:H + 2, :, :] = zrow
    xpad_ref[:, 0:1, :] = zcol
    xpad_ref[:, W + 1:W + 2, :] = zcol

    # im2col: per image, pad once, then 9 strided copies into contiguous K-columns.
    for i in range(nb):
        xpad_ref[1:H + 1, 1:W + 1, :] = x_ref[i].astype(xpad_ref.dtype)
        for t in range(9):
            p, q = t // 3, t % 3
            col_ref[i * HW:(i + 1) * HW, t * C1:(t + 1) * C1] = (
                xpad_ref[p:p + H, q:q + W, :].reshape(HW, C1))

    # Single MXU matmul (M = nb*H*W, K = 9*C1, N = C2p lanes), f32 accumulation,
    # bias add and a direct lane-dense store -- no f32 accumulator scratch.
    y = jnp.dot(col_ref[...], w_ref[...], preferred_element_type=jnp.float32)
    o_ref[...] = (y + b_ref[...]).astype(o_ref.dtype)


def conv2x2_forward(x_nchw, w_oihw, b, *, compute_dtype=jnp.bfloat16):
    """x_nchw: (N, C1, H, W); w_oihw: (C2, C1, 2, 2); b: (C2,). Returns (N, C2, H, W).

    compute_dtype: dtype of the MXU operands (bf16 = peak MXU rate); accumulation is
    always f32. Pass compute_dtype=x_nchw.dtype for the exact path.
    """
    N, C1, H, W = x_nchw.shape
    C2 = w_oihw.shape[0]
    out_dtype = x_nchw.dtype
    if compute_dtype is None:
        compute_dtype = out_dtype

    # Lane-dense output channels; >128 rounds to 256-multiples (fills the 256x256
    # MXU on v6e/v7x; harmless on v5e's 128-wide MXU).
    C2p = LANES if C2 <= LANES else _round_up(C2, 2 * LANES)
    K = 9 * C1
    HW = H * W

    # ---- algebraic fusion: conv2x2(pad=1) + 4-way shifted sum == one 3x3 conv ----
    # TODO(synk): in a real model keep activations NHWC (and C2p lanes) end-to-end so
    # these wrapper transposes + the channel slice don't cost extra HBM passes.
    x_nhwc = jnp.transpose(x_nchw, (0, 2, 3, 1))                       # (N, H, W, C1)
    w_hwio = jnp.transpose(w_oihw, (2, 3, 1, 0))                       # (2, 2, C1, C2)
    w_eff = jnp.zeros((3, 3, C1, C2), dtype=w_hwio.dtype)
    for di in range(2):
        for dj in range(2):
            for a in range(2):
                for c in range(2):
                    w_eff = w_eff.at[di + a, dj + c].add(w_hwio[di, dj])
    w_eff = jnp.pad(w_eff.reshape(K, C2), ((0, 0), (0, C2p - C2))).astype(compute_dtype)
    b_eff = jnp.pad(4.0 * b.astype(jnp.float32), (0, C2p - C2)).reshape(1, C2p)

    # ---- per-step batch (nb) and generation-aware VMEM budget ----
    xb = jnp.dtype(out_dtype).itemsize
    cb = jnp.dtype(compute_dtype).itemsize

    def step_bytes(nb):
        return (2 * nb * HW * C1 * xb           # input block   (double-buffered)
                + 2 * K * C2p * cb              # weight block  (double-buffered)
                + 2 * C2p * 4                   # bias block    (double-buffered)
                + 2 * nb * HW * C2p * xb        # output block  (double-buffered)
                + (H + 2) * (W + 2) * C1 * cb   # padded-input scratch
                + nb * HW * K * cb)             # im2col scratch

    vmem_budget = _vmem_capacity_bytes() // 2
    # >=2 grid steps keep both v7x TensorCores busy; otherwise fold the whole batch
    # into one step's matmul M-dim to amortize the ~0.35us/step overhead on
    # single-TensorCore parts (v5e/v6e).
    nb = N // 2 if (N >= 2 and N % 2 == 0) else 1
    while nb > 1 and (N % nb != 0 or step_bytes(nb) > vmem_budget):
        nb -= 1
    grid = (N // nb,)
    vmem_limit = int(min(max(2 * step_bytes(nb), 16 * 1024 * 1024), vmem_budget))

    out_flat = pl.pallas_call(
        conv2x2_fused_kernel,
        out_shape=jax.ShapeDtypeStruct((N * HW, C2p), out_dtype),
        grid_spec=pltpu.PrefetchScalarGridSpec(
            num_scalar_prefetch=0,
            grid=grid,
            in_specs=[
                pl.BlockSpec((nb, H, W, C1), lambda g: (g, 0, 0, 0)),
                pl.BlockSpec((K, C2p), lambda g: (0, 0)),
                pl.BlockSpec((1, C2p), lambda g: (0, 0)),
            ],
            out_specs=pl.BlockSpec((nb * HW, C2p), lambda g: (g, 0)),
            scratch_shapes=[
                pltpu.VMEM((H + 2, W + 2, C1), compute_dtype),
                pltpu.VMEM((nb * HW, K), compute_dtype),
            ],
        ),
        compiler_params=pltpu.CompilerParams(
            dimension_semantics=("parallel",),
            vmem_limit_bytes=vmem_limit,
        ),
    )(x_nhwc, w_eff, b_eff)

    out_nhwc = out_flat.reshape(N, H, W, C2p)[:, :, :, :C2]
    return jnp.transpose(out_nhwc, (0, 3, 1, 2))                        # back to NCHW


def conv2x2_reference(x_nchw, w_oihw, b):
    """Pure-JAX reference matching the PyTorch module semantics (f32)."""
    x_nhwc = jnp.transpose(x_nchw, (0, 2, 3, 1))
    w_hwio = jnp.transpose(w_oihw, (2, 3, 1, 0))
    y = lax.conv_general_dilated(
        x_nhwc, w_hwio, window_strides=(1, 1), padding=[(1, 1), (1, 1)],
        dimension_numbers=("NHWC", "HWIO", "NHWC")) + b
    out = y[:, 1:, 1:, :] + y[:, :-1, :-1, :] + y[:, 1:, :-1, :] + y[:, :-1, 1:, :]
    return jnp.transpose(out, (0, 3, 1, 2))


if __name__ == "__main__":
    N, C1, C2, H, W = 2, 4, 8, 16, 16

    key = jax.random.PRNGKey(0)
    kx, kw, kb = jax.random.split(key, 3)

    # Deterministic parameter init (same shapes / scale convention as nn.Conv2d).
    fan_in = C1 * 2 * 2
    bound = 1.0 / jnp.sqrt(fan_in)
    x = jax.random.normal(kx, (N, C1, H, W), dtype=jnp.float32)
    w = jax.random.uniform(kw, (C2, C1, 2, 2), minval=-bound, maxval=bound,
                           dtype=jnp.float32)
    b = jax.random.uniform(kb, (C2,), minval=-bound, maxval=bound,
                           dtype=jnp.float32)

    ref = jax.block_until_ready(conv2x2_reference(x, w, b))

    # Exact path: operands stay f32.
    out_f32 = jax.block_until_ready(conv2x2_forward(x, w, b, compute_dtype=jnp.float32))
    assert out_f32.shape == (N, C2, H, W), out_f32.shape
    assert jnp.allclose(out_f32, ref, rtol=1e-4, atol=1e-4), \
        float(jnp.max(jnp.abs(out_f32 - ref)))

    # MXU-peak path: bf16 operands, f32 accumulation (default).
    out_bf16 = jax.block_until_ready(conv2x2_forward(x, w, b, compute_dtype=jnp.bfloat16))
    assert out_bf16.shape == (N, C2, H, W), out_bf16.shape
    assert jnp.allclose(out_bf16, ref, rtol=2e-2, atol=2e-2), \
        float(jnp.max(jnp.abs(out_bf16 - ref)))

    print("KERNEL_OK")
</pallas_src>

<mosaic_0001>
module attributes {stable_mosaic.version = 11 : i64} {
  func.func @conv2x2_fused_kernel(%arg0: i32, %arg1: memref<1x16x16x4xf32, #tpu.memory_space<vmem>>, %arg2: memref<36x128xf32, #tpu.memory_space<vmem>>, %arg3: memref<1x128xf32, #tpu.memory_space<vmem>>, %arg4: memref<256x128xf32, #tpu.memory_space<vmem>>, %arg5: memref<18x18x4xf32, #tpu.memory_space<vmem>>, %arg6: memref<256x36xf32, #tpu.memory_space<vmem>>) attributes {dimension_semantics = [#tpu.dimension_semantics<parallel>], iteration_bounds = array<i64: 2>, scalar_prefetch = 0 : i64, scratch_operands = 2 : i64, tpu.core_type = #tpu.core_type<tc>, window_params = [{transform_indices = @transform_0, window_bounds = array<i64: 1, 16, 16, 4>}, {pipeline_mode = #tpu.pipeline_mode<synchronous>, transform_indices = @transform_1, window_bounds = array<i64: 36, 128>}, {pipeline_mode = #tpu.pipeline_mode<synchronous>, transform_indices = @transform_2, window_bounds = array<i64: 1, 128>}, {transform_indices = @transform_3, window_bounds = array<i64: 256, 128>}]} {
    %cst = arith.constant 0.000000e+00 : f32
    %0 = vector.broadcast %cst : f32 to vector<1x18x4xf32>
    %cst_0 = arith.constant 0.000000e+00 : f32
    %1 = vector.broadcast %cst_0 : f32 to vector<18x1x4xf32>
    %c0 = arith.constant 0 : index
    %c0_1 = arith.constant 0 : index
    %c0_2 = arith.constant 0 : index
    %2 = vector.load %arg5[%c0, %c0_1, %c0_2] : memref<18x18x4xf32, #tpu.memory_space<vmem>>, vector<1x18x4xf32>
    tpu.vector_store %arg5[%c0, %c0_1, %c0_2], %0 {strides = array<i32>} : memref<18x18x4xf32, #tpu.memory_space<vmem>>, vector<1x18x4xf32>,
    %c17 = arith.constant 17 : index
    %c0_3 = arith.constant 0 : index
    %c0_4 = arith.constant 0 : index
    %3 = vector.load %arg5[%c17, %c0_3, %c0_4] : memref<18x18x4xf32, #tpu.memory_space<vmem>>, vector<1x18x4xf32>
    tpu.vector_store %arg5[%c17, %c0_3, %c0_4], %0 {strides = array<i32>} : memref<18x18x4xf32, #tpu.memory_space<vmem>>, vector<1x18x4xf32>,
    %c0_5 = arith.constant 0 : index
    %c0_6 = arith.constant 0 : index
    %c0_7 = arith.constant 0 : index
    %4 = vector.load %arg5[%c0_5, %c0_6, %c0_7] : memref<18x18x4xf32, #tpu.memory_space<vmem>>, vector<18x1x4xf32>
    tpu.vector_store %arg5[%c0_5, %c0_6, %c0_7], %1 {strides = array<i32>} : memref<18x18x4xf32, #tpu.memory_space<vmem>>, vector<18x1x4xf32>,
    %c0_8 = arith.constant 0 : index
    %c17_9 = arith.constant 17 : index
    %c0_10 = arith.constant 0 : index
    %5 = vector.load %arg5[%c0_8, %c17_9, %c0_10] : memref<18x18x4xf32, #tpu.memory_space<vmem>>, vector<18x1x4xf32>
    tpu.vector_store %arg5[%c0_8, %c17_9, %c0_10], %1 {strides = array<i32>} : memref<18x18x4xf32, #tpu.memory_space<vmem>>, vector<18x1x4xf32>,
    %c0_11 = arith.constant 0 : index
    %c0_12 = arith.constant 0 : index
    %c0_13 = arith.constant 0 : index
    %c0_14 = arith.constant 0 : index
    %6 = vector.load %arg1[%c0_11, %c0_12, %c0_13, %c0_14] : memref<1x16x16x4xf32, #tpu.memory_space<vmem>>, vector<1x16x16x4xf32>
    %7 = vector.shape_cast %6 : vector<1x16x16x4xf32> to vector<16x16x4xf32>
    %c1 = arith.constant 1 : index
    %c1_15 = arith.constant 1 : index
    %c0_16 = arith.constant 0 : index
    %8 = vector.load %arg5[%c1, %c1_15, %c0_16] : memref<18x18x4xf32, #tpu.memory_space<vmem>>, vector<16x16x4xf32>
    tpu.vector_store %arg5[%c1, %c1_15, %c0_16], %7 {strides = array<i32>} : memref<18x18x4xf32, #tpu.memory_space<vmem>>, vector<16x16x4xf32>,
    %c0_17 = arith.constant 0 : index
    %c0_18 = arith.constant 0 : index
    %c0_19 = arith.constant 0 : index
    %9 = vector.load %arg5[%c0_17, %c0_18, %c0_19] : memref<18x18x4xf32, #tpu.memory_space<vmem>>, vector<16x16x4xf32>
    %10 = vector.shape_cast %9 : vector<16x16x4xf32> to vector<256x4xf32>
    %c0_20 = arith.constant 0 : index
    %c0_21 = arith.constant 0 : index
    %11 = vector.load %arg6[%c0_20, %c0_21] : memref<256x36xf32, #tpu.memory_space<vmem>>, vector<256x4xf32>
    tpu.vector_store %arg6[%c0_20, %c0_21], %10 {strides = array<i32>} : memref<256x36xf32, #tpu.memory_space<vmem>>, vector<256x4xf32>,
    %c0_22 = arith.constant 0 : index
    %c1_23 = arith.constant 1 : index
    %c0_24 = arith.constant 0 : index
    %12 = vector.load %arg5[%c0_22, %c1_23, %c0_24] : memref<18x18x4xf32, #tpu.memory_space<vmem>>, vector<16x16x4xf32>
    %13 = vector.shape_cast %12 : vector<16x16x4xf32> to vector<256x4xf32>
    %c0_25 = arith.constant 0 : index
    %c4 = arith.constant 4 : index
    %14 = vector.load %arg6[%c0_25, %c4] : memref<256x36xf32, #tpu.memory_space<vmem>>, vector<256x4xf32>
    tpu.vector_store %arg6[%c0_25, %c4], %13 {strides = array<i32>} : memref<256x36xf32, #tpu.memory_space<vmem>>, vector<256x4xf32>,
    %c0_26 = arith.constant 0 : index
    %c2 = arith.constant 2 : index
    %c0_27 = arith.constant 0 : index
    %15 = vector.load %arg5[%c0_26, %c2, %c0_27] : memref<18x18x4xf32, #tpu.memory_space<vmem>>, vector<16x16x4xf32>
    %16 = vector.shape_cast %15 : vector<16x16x4xf32> to vector<256x4xf32>
    %c0_28 = arith.constant 0 : index
    %c8 = arith.constant 8 : index
    %17 = vector.load %arg6[%c0_28, %c8] : memref<256x36xf32, #tpu.memory_space<vmem>>, vector<256x4xf32>
    tpu.vector_store %arg6[%c0_28, %c8], %16 {strides = array<i32>} : memref<256x36xf32, #tpu.memory_space<vmem>>, vector<256x4xf32>,
    %c1_29 = arith.constant 1 : index
    %c0_30 = arith.constant 0 : index
    %c0_31 = arith.constant 0 : index
    %18 = vector.load %arg5[%c1_29, %c0_30, %c0_31] : memref<18x18x4xf32, #tpu.memory_space<vmem>>, vector<16x16x4xf32>
    %19 = vector.shape_cast %18 : vector<16x16x4xf32> to vector<256x4xf32>
    %c0_32 = arith.constant 0 : index
    %c12 = arith.constant 12 : index
    %20 = vector.load %arg6[%c0_32, %c12] : memref<256x36xf32, #tpu.memory_space<vmem>>, vector<256x4xf32>
    tpu.vector_store %arg6[%c0_32, %c12], %19 {strides = array<i32>} : memref<256x36xf32, #tpu.memory_space<vmem>>, vector<256x4xf32>,
    %c1_33 = arith.constant 1 : index
    %c1_34 = arith.constant 1 : index
    %c0_35 = arith.constant 0 : index
    %21 = vector.load %arg5[%c1_33, %c1_34, %c0_35] : memref<18x18x4xf32, #tpu.memory_space<vmem>>, vector<16x16x4xf32>
    %22 = vector.shape_cast %21 : vector<16x16x4xf32> to vector<256x4xf32>
    %c0_36 = arith.constant 0 : index
    %c16 = arith.constant 16 : index
    %23 = vector.load %arg6[%c0_36, %c16] : memref<256x36xf32, #tpu.memory_space<vmem>>, vector<256x4xf32>
    tpu.vector_store %arg6[%c0_36, %c16], %22 {strides = array<i32>} : memref<256x36xf32, #tpu.memory_space<vmem>>, vector<256x4xf32>,
    %c1_37 = arith.constant 1 : index
    %c2_38 = arith.constant 2 : index
    %c0_39 = arith.constant 0 : index
    %24 = vector.load %arg5[%c1_37, %c2_38, %c0_39] : memref<18x18x4xf32, #tpu.memory_space<vmem>>, vector<16x16x4xf32>
    %25 = vector.shape_cast %24 : vector<16x16x4xf32> to vector<256x4xf32>
    %c0_40 = arith.constant 0 : index
    %c20 = arith.constant 20 : index
    %26 = vector.load %arg6[%c0_40, %c20] : memref<256x36xf32, #tpu.memory_space<vmem>>, vector<256x4xf32>
    tpu.vector_store %arg6[%c0_40, %c20], %25 {strides = array<i32>} : memref<256x36xf32, #tpu.memory_space<vmem>>, vector<256x4xf32>,
    %c2_41 = arith.constant 2 : index
    %c0_42 = arith.constant 0 : index
    %c0_43 = arith.constant 0 : index
    %27 = vector.load %arg5[%c2_41, %c0_42, %c0_43] : memref<18x18x4xf32, #tpu.memory_space<vmem>>, vector<16x16x4xf32>
    %28 = vector.shape_cast %27 : vector<16x16x4xf32> to vector<256x4xf32>
    %c0_44 = arith.constant 0 : index
    %c24 = arith.constant 24 : index
    %29 = vector.load %arg6[%c0_44, %c24] : memref<256x36xf32, #tpu.memory_space<vmem>>, vector<256x4xf32>
    tpu.vector_store %arg6[%c0_44, %c24], %28 {strides = array<i32>} : memref<256x36xf32, #tpu.memory_space<vmem>>, vector<256x4xf32>,
    %c2_45 = arith.constant 2 : index
    %c1_46 = arith.constant 1 : index
    %c0_47 = arith.constant 0 : index
    %30 = vector.load %arg5[%c2_45, %c1_46, %c0_47] : memref<18x18x4xf32, #tpu.memory_space<vmem>>, vector<16x16x4xf32>
    %31 = vector.shape_cast %30 : vector<16x16x4xf32> to vector<256x4xf32>
    %c0_48 = arith.constant 0 : index
    %c28 = arith.constant 28 : index
    %32 = vector.load %arg6[%c0_48, %c28] : memref<256x36xf32, #tpu.memory_space<vmem>>, vector<256x4xf32>
    tpu.vector_store %arg6[%c0_48, %c28], %31 {strides = array<i32>} : memref<256x36xf32, #tpu.memory_space<vmem>>, vector<256x4xf32>,
    %c2_49 = arith.constant 2 : index
    %c2_50 = arith.constant 2 : index
    %c0_51 = arith.constant 0 : index
    %33 = vector.load %arg5[%c2_49, %c2_50, %c0_51] : memref<18x18x4xf32, #tpu.memory_space<vmem>>, vector<16x16x4xf32>
    %34 = vector.shape_cast %33 : vector<16x16x4xf32> to vector<256x4xf32>
    %c0_52 = arith.constant 0 : index
    %c32 = arith.constant 32 : index
    %35 = vector.load %arg6[%c0_52, %c32] : memref<256x36xf32, #tpu.memory_space<vmem>>, vector<256x4xf32>
    tpu.vector_store %arg6[%c0_52, %c32], %34 {strides = array<i32>} : memref<256x36xf32, #tpu.memory_space<vmem>>, vector<256x4xf32>,
    %c0_53 = arith.constant 0 : index
    %c0_54 = arith.constant 0 : index
    %36 = vector.load %arg6[%c0_53, %c0_54] : memref<256x36xf32, #tpu.memory_space<vmem>>, vector<256x36xf32>
    %c0_55 = arith.constant 0 : index
    %c0_56 = arith.constant 0 : index
    %37 = vector.load %arg2[%c0_55, %c0_56] : memref<36x128xf32, #tpu.memory_space<vmem>>, vector<36x128xf32>
    %cst_57 = arith.constant dense<0.000000e+00> : vector<256x128xf32>
    %38 = tpu.matmul %36, %37, %cst_57 {dimension_numbers = #tpu.dot_dimension_numbers<[1], [0], [0], [1], [0, 0, 1, 1], [], []>} : vector<256x36xf32>, vector<36x128xf32>, vector<256x128xf32> -> vector<256x128xf32>
    %c0_58 = arith.constant 0 : index
    %c0_59 = arith.constant 0 : index
    %39 = vector.load %arg3[%c0_58, %c0_59] : memref<1x128xf32, #tpu.memory_space<vmem>>, vector<1x128xf32>
    %40 = vector.broadcast %39 : vector<1x128xf32> to vector<256x128xf32>
    %41 = arith.addf %38, %40 : vector<256x128xf32>
    %c0_60 = arith.constant 0 : index
    %c0_61 = arith.constant 0 : index
    %42 = vector.load %arg4[%c0_60, %c0_61] : memref<256x128xf32, #tpu.memory_space<vmem>>, vector<256x128xf32>
    tpu.vector_store %arg4[%c0_60, %c0_61], %41 {strides = array<i32>} : memref<256x128xf32, #tpu.memory_space<vmem>>, vector<256x128xf32>,
    return
  }
  func.func @transform_0(%arg0: i32) -> (i32, i32, i32, i32) {
    %c0_i32 = arith.constant 0 : i32
    %c0_i32_0 = arith.constant 0 : i32
    %c0_i32_1 = arith.constant 0 : i32
    %c0_i32_2 = arith.constant 0 : i32
    return %arg0, %c0_i32, %c0_i32_0, %c0_i32_1 : i32, i32, i32, i32
  }
  func.func @transform_1(%arg0: i32) -> (i32, i32) {
    %c0_i32 = arith.constant 0 : i32
    %c0_i32_0 = arith.constant 0 : i32
    %c0_i32_1 = arith.constant 0 : i32
    return %c0_i32, %c0_i32_0 : i32, i32
  }
  func.func @transform_2(%arg0: i32) -> (i32, i32) {
    %c0_i32 = arith.constant 0 : i32
    %c0_i32_0 = arith.constant 0 : i32
    %c0_i32_1 = arith.constant 0 : i32
    return %c0_i32, %c0_i32_0 : i32, i32
  }
  func.func @transform_3(%arg0: i32) -> (i32, i32) {
    %c0_i32 = arith.constant 0 : i32
    %c0_i32_0 = arith.constant 0 : i32
    return %arg0, %c0_i32 : i32, i32
  }
}

</mosaic_0001>

<llo_original>
// kernel: tpu_custom_call.1
$region0: #{tpu_custom_call.1}
  #allocation0 [shape = 'u32[]', space=smem, size = 0x4, offset = 0x4, fixed_abs, tag = 'smem constant byte address 0x4 - core index']
  #allocation1 [shape = 'u32[144,128]{1,0:T(1,128)}', space=vmem, size = 0x12000, scoped, tag = 'internal scratch']
  #allocation2 [shape = 'f32[18,18,4]{2,1,0:T(8,128)}', space=vmem, size = 0x36000, scoped, tag = 'scratch operand']
  #allocation3 [shape = 'f32[256,36]{1,0:T(8,128)}', space=vmem, size = 0x20000, scoped, tag = 'scratch operand']
  %s0 = inlined_call_operand.vmem [shape: f32[2,16,16,4], index: 0, kind: input, shape index: {}]
  %s1 = inlined_call_operand.vmem [shape: f32[36,128], index: 1, kind: input, shape index: {}]
  %s2 = inlined_call_operand.vmem [shape: f32[1,128], index: 2, kind: input, shape index: {}]
  %s3 = inlined_call_operand.hbm [shape: f32[512,128], index: 3, kind: output, shape index: {}]
  %s4 = sld [smem:[#allocation0]]
  $region45: #{tpu_custom_call.1} parent=0
    _
  %s6 = ssub.s32 1, %s4
  %s7 = scalar_select 0, %s6, %s4
  $region1: #{tpu_custom_call.1} parent=0
    #allocation4 [shape = 'u8[262144]{0}', space=vmem, size = 0x40000, scoped, tag = 'output window, operand 0']
    #allocation5 [shape = 's32[2]{0}', space=sflag, size = 0x8, scoped, tag = 'scoped memory for tpu_custom_call.1']
    %8 = vsyncpa [#allocation5], 0
    %s9 = scalar_lea.sflag [#allocation5], 1
    %10 = vsyncpa %s9, 0
    loop: start=0, step=1, limit=4
    $region2: #{tpu_custom_call.1} parent=1 // loop_pre_header
      _
    $region3: #{tpu_custom_call.1} parent=1 // loop_header
      %s12 = sphi 0, %s16
      %p13 = scmp.ge.s32.totalorder %s12, 4
      %s22 = sphi 0, %s24
      %s25 = sphi 0, %s22
      %s26 = sphi 0, %s25
      %s42 = sphi 0, %s26
      %s46 = sphi 0, %s46
      %s48 = sphi 0, %s46
      %s49 = sphi 0, %s48
      %s63 = sphi 0, %s49
      %s67 = sphi 0, %s67
      %s69 = sphi 0, %s67
      %s70 = sphi 0, %s69
      %s84 = sphi 0, %s70
      %s90 = sphi 0, %s92
      %s93 = sphi 0, %s90
      %s94 = sphi 0, %s93
      %s110 = sphi 0, %s94
    $region4: #{tpu_custom_call.1} parent=1 // loop_header_branch
      %15 = sbr.rel (%p13) target = $region8
    $region5: #{tpu_custom_call.1} parent=1 // loop_body
      %s17 = ssub.s32 %s12, 1
      %s18 = ssub.s32 %s12, 2
      %s19 = sadd.s32 %s12, 1
      %s20 = ssub.s32 %s12, %s19
      %p21 = scmp.eq.s32.totalorder %s20, 0
      %s23 = sadd.s32 %s22, 1
      %s24 = scalar_select %p21, %s22, %s23
      %p27 = pneg %p21
      %p28 = scmp.eq.s32.totalorder %s12, 1
      %p29 = por %p27, %p28
      %p30 = scmp.ne.s32.totalorder %s22, %s25
      %p31 = scmp.eq.s32.totalorder %s12, 0
      %p32 = por %p30, %p31
      %p33 = scmp.ne.s32.totalorder %s22, %s25
      %p34 = scmp.eq.s32.totalorder %s17, 1
      %p35 = por %p33, %p34
      %p36 = scmp.ne.s32.totalorder %s25, %s26
      %p37 = scmp.eq.s32.totalorder %s17, 0
      %p38 = por %p36, %p37
      %p39 = scmp.ne.s32.totalorder %s25, %s26
      %p40 = scmp.eq.s32.totalorder %s18, 1
      %p41 = por %p39, %p40
      %p43 = scmp.ne.s32.totalorder %s26, %s42
      %p44 = scmp.eq.s32.totalorder %s18, 0
      %p45 = por %p43, %p44
      %s47 = sadd.s32 %s46, 1
      %p50 = scmp.eq.s32.totalorder %s12, 1
      %p51 = scmp.ne.s32.totalorder %s46, %s48
      %p52 = scmp.eq.s32.totalorder %s12, 0
      %p53 = por %p51, %p52
      %p54 = scmp.ne.s32.totalorder %s46, %s48
      %p55 = scmp.eq.s32.totalorder %s17, 1
      %p56 = por %p54, %p55
      %p57 = scmp.ne.s32.totalorder %s48, %s49
      %p58 = scmp.eq.s32.totalorder %s17, 0
      %p59 = por %p57, %p58
      %p60 = scmp.ne.s32.totalorder %s48, %s49
      %p61 = scmp.eq.s32.totalorder %s18, 1
      %p62 = por %p60, %p61
      %p64 = scmp.ne.s32.totalorder %s49, %s63
      %p65 = scmp.eq.s32.totalorder %s18, 0
      %p66 = por %p64, %p65
      %s68 = sadd.s32 %s67, 1
      %p71 = scmp.eq.s32.totalorder %s12, 1
      %p72 = scmp.ne.s32.totalorder %s67, %s69
      %p73 = scmp.eq.s32.totalorder %s12, 0
      %p74 = por %p72, %p73
      %p75 = scmp.ne.s32.totalorder %s67, %s69
      %p76 = scmp.eq.s32.totalorder %s17, 1
      %p77 = por %p75, %p76
      %p78 = scmp.ne.s32.totalorder %s69, %s70
      %p79 = scmp.eq.s32.totalorder %s17, 0
      %p80 = por %p78, %p79
      %p81 = scmp.ne.s32.totalorder %s69, %s70
      %p82 = scmp.eq.s32.totalorder %s18, 1
      %p83 = por %p81, %p82
      %p85 = scmp.ne.s32.totalorder %s70, %s84
      %p86 = scmp.eq.s32.totalorder %s18, 0
      %p87 = por %p85, %p86
      %s88 = ssub.s32 %s12, %s19
      %p89 = scmp.eq.s32.totalorder %s88, 0
      %s91 = sadd.s32 %s90, 1
      %s92 = scalar_select %p89, %s90, %s91
      %p95 = pneg %p89
      %p96 = scmp.eq.s32.totalorder %s12, 1
      %p97 = por %p95, %p96
      %p98 = scmp.ne.s32.totalorder %s90, %s93
      %p99 = scmp.eq.s32.totalorder %s12, 0
      %p100 = por %p98, %p99
      %p101 = scmp.ne.s32.totalorder %s90, %s93
      %p102 = scmp.eq.s32.totalorder %s17, 1
      %p103 = por %p101, %p102
      %p104 = scmp.ne.s32.totalorder %s93, %s94
      %p105 = scmp.eq.s32.totalorder %s17, 0
      %p106 = por %p104, %p105
      %p107 = scmp.ne.s32.totalorder %s93, %s94
      %p108 = scmp.eq.s32.totalorder %s18, 1
      %p109 = por %p107, %p108
      %p111 = scmp.ne.s32.totalorder %s94, %s110
      %p112 = scmp.eq.s32.totalorder %s18, 0
      %p113 = por %p111, %p112
      %p114 = scmp.le.s32.totalorder 1, %s12
      %p115 = scmp.lt.s32.totalorder %s12, 3
      %p116 = pnand %p114, %p115
      %p117 = pneg %p116
      // Predicated region
      $region9: #{tpu_custom_call.1} parent=5 // pred_check
        _
      $region10: #{tpu_custom_call.1} parent=5 // pred_check_branch
        %119 = sbr.rel (%p116) target = $region12
      $region11: #{tpu_custom_call.1} parent=5 // pred_region
        %s120 = ssub.s32 %s12, 1
        // Predicated region
        $region13: #{tpu_custom_call.1} parent=11 // pred_check
          %p121 = pneg %p59
        $region14: #{tpu_custom_call.1} parent=11 // pred_check_branch
          %123 = sbr.rel (%p121) target = $region16
        $region15: #{tpu_custom_call.1} parent=11 // pred_region
          _
        $region16: #{tpu_custom_call.1} parent=11 // pred_fallthru
          _
        // Predicated region
        $region17: #{tpu_custom_call.1} parent=11 // pred_check
          %p124 = pneg %p80
        $region18: #{tpu_custom_call.1} parent=11 // pred_check_branch
          %126 = sbr.rel (%p124) target = $region20
        $region19: #{tpu_custom_call.1} parent=11 // pred_region
          _
        $region20: #{tpu_custom_call.1} parent=11 // pred_fallthru
          _
      $region12: #{tpu_custom_call.1} parent=5 // pred_fallthru
        _
      %p127 = scmp.lt.s32.totalorder %s12, 2
      // Predicated region
      $region21: #{tpu_custom_call.1} parent=5 // pred_check
        %p128 = pneg %p127
      $region22: #{tpu_custom_call.1} parent=5 // pred_check_branch
        %130 = sbr.rel (%p128) target = $region24
      $region23: #{tpu_custom_call.1} parent=5 // pred_region
        // Predicated region
        $region25: #{tpu_custom_call.1} parent=23 // pred_check
          %p131 = pneg %p32
        $region26: #{tpu_custom_call.1} parent=23 // pred_check_branch
          %133 = sbr.rel (%p131) target = $region28
        $region27: #{tpu_custom_call.1} parent=23 // pred_region
          %p134 = scmp.lt.s32.totalorder %s12, 1
          %s135 = scalar_select %p134, %s12, 1
          %s136 = smul.addr %s135, 32
          %s137 = smul.addr %s136, 8
          %s138 = scalar_lea.vmem %s0, %s137
        $region28: #{tpu_custom_call.1} parent=23 // pred_fallthru
          _
      $region24: #{tpu_custom_call.1} parent=5 // pred_fallthru
        _
      %p139 = scmp.le.s32.totalorder 1, %s12
      %p140 = scmp.lt.s32.totalorder %s12, 3
      %p141 = pnand %p139, %p140
      %p142 = pneg %p141
      // Predicated region
      $region29: #{tpu_custom_call.1} parent=5 // pred_check
        _
      $region30: #{tpu_custom_call.1} parent=5 // pred_check_branch
        %144 = sbr.rel (%p141) target = $region32
      $region31: #{tpu_custom_call.1} parent=5 // pred_region
        %s145 = ssub.s32 %s12, 1
        %p146 = scmp.lt.s32.totalorder %s17, 1
        %s147 = scalar_select %p146, %s17, 1
        %s148 = smul.addr %s147, 32
        %s149 = smul.addr %s148, 8
        %s150 = scalar_lea.vmem %s0, %s149
        %p151 = pneg %p38
        %p152 = pneg %p35
        %p153 = pneg %p59
        %p154 = pneg %p56
        %p155 = pneg %p80
        %p156 = pneg %p77
        %p157 = pneg %p106
        %p158 = pneg %p103
        %s159 = sand.u32 %s93, 1
        %s160 = scalar_lea.sflag [#allocation5], %s159
        %s161 = sand.u32 %s93, 1
        %s162 = smul.addr %s161, 256
        %s163 = scalar_lea.vmem [#allocation4], %s162
        %p164 = scmp.lt.s32.totalorder %s17, 1
        %s165 = scalar_select %p164, %s17, 1
        %s166 = smul.addr %s165, 32
        %s167 = smul.addr %s166, 8
        %s168 = scalar_lea.vmem %s0, %s167
        %s169 = smul.u32 32, %s17
        %vm170 = vcmask 31744
        %171 = vst.msk [vmem:[#allocation2] sm:$0xff] %vm170, 0.0
        %172 = vst.msk [vmem:[#allocation2 + $0x8] sm:$0xff] %vm170, 0.0
        %vm173 = vcmask 25600
        %174 = vst.msk [vmem:[#allocation2 + $0x10] sm:$0x3] %vm173, 0.0
        %s175 = scalar_lea.vmem [#allocation2], 408
        %176 = vst.msk [vmem:[%s175] sm:$0xff] %vm170, 0.0
        %177 = vst.msk [vmem:[%s175 + $0x8] sm:$0xff] %vm170, 0.0
        %178 = vst.msk [vmem:[%s175 + $0x10] sm:$0x3] %vm173, 0.0
        %vm179 = vcmask 24576
        %180 = vst.msk [vmem:[#allocation2] sm:$0x1] %vm179, 0.0
        %181 = vst.msk [vmem:[#allocation2 + $0x18] sm:$0x1] %vm179, 0.0
        %182 = vst.msk [vmem:[#allocation2 + $0x30] sm:$0x1] %vm179, 0.0
        %183 = vst.msk [vmem:[#allocation2 + $0x48] sm:$0x1] %vm179, 0.0
        %184 = vst.msk [vmem:[#allocation2 + $0x60] sm:$0x1] %vm179, 0.0
        %185 = vst.msk [vmem:[#allocation2 + $0x78] sm:$0x1] %vm179, 0.0
        %186 = vst.msk [vmem:[#allocation2 + $0x90] sm:$0x1] %vm179, 0.0
        %187 = vst.msk [vmem:[#allocation2 + $0xa8] sm:$0x1] %vm179, 0.0
        %188 = vst.msk [vmem:[#allocation2 + $0xc0] sm:$0x1] %vm179, 0.0
        %189 = vst.msk [vmem:[#allocation2 + $0xd8] sm:$0x1] %vm179, 0.0
        %190 = vst.msk [vmem:[#allocation2 + $0xf0] sm:$0x1] %vm179, 0.0
        %191 = vst.msk [vmem:[#allocation2 + $0x108] sm:$0x1] %vm179, 0.0
        %192 = vst.msk [vmem:[#allocation2 + $0x120] sm:$0x1] %vm179, 0.0
        %193 = vst.msk [vmem:[#allocation2 + $0x138] sm:$0x1] %vm179, 0.0
        %194 = vst.msk [vmem:[#allocation2 + $0x150] sm:$0x1] %vm179, 0.0
        %195 = vst.msk [vmem:[#allocation2 + $0x168] sm:$0x1] %vm179, 0.0
        %196 = vst.msk [vmem:[#allocation2 + $0x180] sm:$0x1] %vm179, 0.0
        %197 = vst.msk [vmem:[#allocation2 + $0x198] sm:$0x1] %vm179, 0.0
        %198 = vst.msk [vmem:[#allocation2 + $0x11] sm:$0x1] %vm179, 0.0
        %199 = vst.msk [vmem:[#allocation2 + $0x29] sm:$0x1] %vm179, 0.0
        %200 = vst.msk [vmem:[#allocation2 + $0x41] sm:$0x1] %vm179, 0.0
        %201 = vst.msk [vmem:[#allocation2 + $0x59] sm:$0x1] %vm179, 0.0
        %202 = vst.msk [vmem:[#allocation2 + $0x71] sm:$0x1] %vm179, 0.0
        %203 = vst.msk [vmem:[#allocation2 + $0x89] sm:$0x1] %vm179, 0.0
        %204 = vst.msk [vmem:[#allocation2 + $0xa1] sm:$0x1] %vm179, 0.0
        %205 = vst.msk [vmem:[#allocation2 + $0xb9] sm:$0x1] %vm179, 0.0
        %206 = vst.msk [vmem:[#allocation2 + $0xd1] sm:$0x1] %vm179, 0.0
        %207 = vst.msk [vmem:[#allocation2 + $0xe9] sm:$0x1] %vm179, 0.0
        %208 = vst.msk [vmem:[#allocation2 + $0x101] sm:$0x1] %vm179, 0.0
        %209 = vst.msk [vmem:[#allocation2 + $0x119] sm:$0x1] %vm179, 0.0
        %210 = vst.msk [vmem:[#allocation2 + $0x131] sm:$0x1] %vm179, 0.0
        %211 = vst.msk [vmem:[#allocation2 + $0x149] sm:$0x1] %vm179, 0.0
        %212 = vst.msk [vmem:[#allocation2 + $0x161] sm:$0x1] %vm179, 0.0
        %213 = vst.msk [vmem:[#allocation2 + $0x179] sm:$0x1] %vm179, 0.0
        %214 = vst.msk [vmem:[#allocation2 + $0x191] sm:$0x1] %vm179, 0.0
        %215 = vst.msk [vmem:[#allocation2 + $0x1a9] sm:$0x1] %vm179, 0.0
        %v216 = vld [vmem:[%s168] sm:$0xff]
        %v217 = vld [vmem:[%s168 + $0x8] sm:$0xff]
        %v218 = vld [vmem:[%s168 + $0x10] sm:$0xff]
        %v219 = vld [vmem:[%s168 + $0x18] sm:$0xff]
        %v220 = vld [vmem:[%s168 + $0x20] sm:$0xff]
        %v221 = vld [vmem:[%s168 + $0x28] sm:$0xff]
        %v222 = vld [vmem:[%s168 + $0x30] sm:$0xff]
        %v223 = vld [vmem:[%s168 + $0x38] sm:$0xff]
        %v224 = vld [vmem:[%s168 + $0x40] sm:$0xff]
        %v225 = vld [vmem:[%s168 + $0x48] sm:$0xff]
        %v226 = vld [vmem:[%s168 + $0x50] sm:$0xff]
        %v227 = vld [vmem:[%s168 + $0x58] sm:$0xff]
        %v228 = vld [vmem:[%s168 + $0x60] sm:$0xff]
        %v229 = vld [vmem:[%s168 + $0x68] sm:$0xff]
        %v230 = vld [vmem:[%s168 + $0x70] sm:$0xff]
        %v231 = vld [vmem:[%s168 + $0x78] sm:$0xff]
        %v232 = vld [vmem:[%s168 + $0x80] sm:$0xff]
        %v233 = vld [vmem:[%s168 + $0x88] sm:$0xff]
        %v234 = vld [vmem:[%s168 + $0x90] sm:$0xff]
        %v235 = vld [vmem:[%s168 + $0x98] sm:$0xff]
        %v236 = vld [vmem:[%s168 + $0xa0] sm:$0xff]
        %v237 = vld [vmem:[%s168 + $0xa8] sm:$0xff]
        %v238 = vld [vmem:[%s168 + $0xb0] sm:$0xff]
        %v239 = vld [vmem:[%s168 + $0xb8] sm:$0xff]
        %v240 = vld [vmem:[%s168 + $0xc0] sm:$0xff]
        %v241 = vld [vmem:[%s168 + $0xc8] sm:$0xff]
        %v242 = vld [vmem:[%s168 + $0xd0] sm:$0xff]
        %v243 = vld [vmem:[%s168 + $0xd8] sm:$0xff]
        %v244 = vld [vmem:[%s168 + $0xe0] sm:$0xff]
        %v245 = vld [vmem:[%s168 + $0xe8] sm:$0xff]
        %v246 = vld [vmem:[%s168 + $0xf0] sm:$0xff]
        %v247 = vld [vmem:[%s168 + $0xf8] sm:$0xff]
        %s248 = scalar_lea.vmem [#allocation2], 24
        %249 = vst.msk [vmem:[%s248 + $0x1] sm:$0xff] %vm170, %v216
        %250 = vst.msk [vmem:[%s248 + $0x9] sm:$0xff] %vm170, %v217
        %251 = vst.msk [vmem:[%s248 + $0x19] sm:$0xff] %vm170, %v218
        %252 = vst.msk [vmem:[%s248 + $0x21] sm:$0xff] %vm170, %v219
        %253 = vst.msk [vmem:[%s248 + $0x31] sm:$0xff] %vm170, %v220
        %254 = vst.msk [vmem:[%s248 + $0x39] sm:$0xff] %vm170, %v221
        %255 = vst.msk [vmem:[%s248 + $0x49] sm:$0xff] %vm170, %v222
        %256 = vst.msk [vmem:[%s248 + $0x51] sm:$0xff] %vm170, %v223
        %257 = vst.msk [vmem:[%s248 + $0x61] sm:$0xff] %vm170, %v224
        %258 = vst.msk [vmem:[%s248 + $0x69] sm:$0xff] %vm170, %v225
        %259 = vst.msk [vmem:[%s248 + $0x79] sm:$0xff] %vm170, %v226
        %260 = vst.msk [vmem:[%s248 + $0x81] sm:$0xff] %vm170, %v227
        %261 = vst.msk [vmem:[%s248 + $0x91] sm:$0xff] %vm170, %v228
        %262 = vst.msk [vmem:[%s248 + $0x99] sm:$0xff] %vm170, %v229
        %263 = vst.msk [vmem:[%s248 + $0xa9] sm:$0xff] %vm170, %v230
        %264 = vst.msk [vmem:[%s248 + $0xb1] sm:$0xff] %vm170, %v231
        %265 = vst.msk [vmem:[%s248 + $0xc1] sm:$0xff] %vm170, %v232
        %266 = vst.msk [vmem:[%s248 + $0xc9] sm:$0xff] %vm170, %v233
        %267 = vst.msk [vmem:[%s248 + $0xd9] sm:$0xff] %vm170, %v234
        %268 = vst.msk [vmem:[%s248 + $0xe1] sm:$0xff] %vm170, %v235
        %269 = vst.msk [vmem:[%s248 + $0xf1] sm:$0xff] %vm170, %v236
        %270 = vst.msk [vmem:[%s248 + $0xf9] sm:$0xff] %vm170, %v237
        %271 = vst.msk [vmem:[%s248 + $0x109] sm:$0xff] %vm170, %v238
        %272 = vst.msk [vmem:[%s248 + $0x111] sm:$0xff] %vm170, %v239
        %273 = vst.msk [vmem:[%s248 + $0x121] sm:$0xff] %vm170, %v240
        %274 = vst.msk [vmem:[%s248 + $0x129] sm:$0xff] %vm170, %v241
        %275 = vst.msk [vmem:[%s248 + $0x139] sm:$0xff] %vm170, %v242
        %276 = vst.msk [vmem:[%s248 + $0x141] sm:$0xff] %vm170, %v243
        %277 = vst.msk [vmem:[%s248 + $0x151] sm:$0xff] %vm170, %v244
        %278 = vst.msk [vmem:[%s248 + $0x159] sm:$0xff] %vm170, %v245
        %279 = vst.msk [vmem:[%s248 + $0x169] sm:$0xff] %vm170, %v246
        %280 = vst.msk [vmem:[%s248 + $0x171] sm:$0xff] %vm170, %v247
        %v281 = vld [vmem:[#allocation2] sm:$0xff]
        %v282 = vld [vmem:[#allocation2 + $0x8] sm:$0xff]
        %v283 = vld [vmem:[#allocation2 + $0x18] sm:$0xff]
        %v284 = vld [vmem:[#allocation2 + $0x20] sm:$0xff]
        %v285 = vld [vmem:[#allocation2 + $0x30] sm:$0xff]
        %v286 = vld [vmem:[#allocation2 + $0x38] sm:$0xff]
        %v287 = vld [vmem:[#allocation2 + $0x48] sm:$0xff]
        %v288 = vld [vmem:[#allocation2 + $0x50] sm:$0xff]
        %v289 = vld [vmem:[#allocation2 + $0x60] sm:$0xff]
        %v290 = vld [vmem:[#allocation2 + $0x68] sm:$0xff]
        %v291 = vld [vmem:[#allocation2 + $0x78] sm:$0xff]
        %v292 = vld [vmem:[#allocation2 + $0x80] sm:$0xff]
        %v293 = vld [vmem:[#allocation2 + $0x90] sm:$0xff]
        %v294 = vld [vmem:[#allocation2 + $0x98] sm:$0xff]
        %v295 = vld [vmem:[#allocation2 + $0xa8] sm:$0xff]
        %v296 = vld [vmem:[#allocation2 + $0xb0] sm:$0xff]
        %v297 = vld [vmem:[#allocation2 + $0xc0] sm:$0xff]
        %v298 = vld [vmem:[#allocation2 + $0xc8] sm:$0xff]
        %v299 = vld [vmem:[#allocation2 + $0xd8] sm:$0xff]
        %v300 = vld [vmem:[#allocation2 + $0xe0] sm:$0xff]
        %v301 = vld [vmem:[#allocation2 + $0xf0] sm:$0xff]
        %v302 = vld [vmem:[#allocation2 + $0xf8] sm:$0xff]
        %v303 = vld [vmem:[#allocation2 + $0x108] sm:$0xff]
        %v304 = vld [vmem:[#allocation2 + $0x110] sm:$0xff]
        %v305 = vld [vmem:[#allocation2 + $0x120] sm:$0xff]
        %v306 = vld [vmem:[#allocation2 + $0x128] sm:$0xff]
        %v307 = vld [vmem:[#allocation2 + $0x138] sm:$0xff]
        %v308 = vld [vmem:[#allocation2 + $0x140] sm:$0xff]
        %v309 = vld [vmem:[#allocation2 + $0x150] sm:$0xff]
        %v310 = vld [vmem:[#allocation2 + $0x158] sm:$0xff]
        %v311 = vld [vmem:[#allocation2 + $0x168] sm:$0xff]
        %v312 = vld [vmem:[#allocation2 + $0x170] sm:$0xff]
        %313 = vst.msk [vmem:[#allocation3] sm:$0xff] %vm170, %v281
        %314 = vst.msk [vmem:[#allocation3 + $0x8] sm:$0xff] %vm170, %v282
        %315 = vst.msk [vmem:[#allocation3 + $0x10] sm:$0xff] %vm170, %v283
        %316 = vst.msk [vmem:[#allocation3 + $0x18] sm:$0xff] %vm170, %v284
        %317 = vst.msk [vmem:[#allocation3 + $0x20] sm:$0xff] %vm170, %v285
        %318 = vst.msk [vmem:[#allocation3 + $0x28] sm:$0xff] %vm170, %v286
        %319 = vst.msk [vmem:[#allocation3 + $0x30] sm:$0xff] %vm170, %v287
        %320 = vst.msk [vmem:[#allocation3 + $0x38] sm:$0xff] %vm170, %v288
        %321 = vst.msk [vmem:[#allocation3 + $0x40] sm:$0xff] %vm170, %v289
        %322 = vst.msk [vmem:[#allocation3 + $0x48] sm:$0xff] %vm170, %v290
        %323 = vst.msk [vmem:[#allocation3 + $0x50] sm:$0xff] %vm170, %v291
        %324 = vst.msk [vmem:[#allocation3 + $0x58] sm:$0xff] %vm170, %v292
        %325 = vst.msk [vmem:[#allocation3 + $0x60] sm:$0xff] %vm170, %v293
        %326 = vst.msk [vmem:[#allocation3 + $0x68] sm:$0xff] %vm170, %v294
        %327 = vst.msk [vmem:[#allocation3 + $0x70] sm:$0xff] %vm170, %v295
        %328 = vst.msk [vmem:[#allocation3 + $0x78] sm:$0xff] %vm170, %v296
        %329 = vst.msk [vmem:[#allocation3 + $0x80] sm:$0xff] %vm170, %v297
        %330 = vst.msk [vmem:[#allocation3 + $0x88] sm:$0xff] %vm170, %v298
        %331 = vst.msk [vmem:[#allocation3 + $0x90] sm:$0xff] %vm170, %v299
        %332 = vst.msk [vmem:[#allocation3 + $0x98] sm:$0xff] %vm170, %v300
        %333 = vst.msk [vmem:[#allocation3 + $0xa0] sm:$0xff] %vm170, %v301
        %334 = vst.msk [vmem:[#allocation3 + $0xa8] sm:$0xff] %vm170, %v302
        %335 = vst.msk [vmem:[#allocation3 + $0xb0] sm:$0xff] %vm170, %v303
        %336 = vst.msk [vmem:[#allocation3 + $0xb8] sm:$0xff] %vm170, %v304
        %337 = vst.msk [vmem:[#allocation3 + $0xc0] sm:$0xff] %vm170, %v305
        %338 = vst.msk [vmem:[#allocation3 + $0xc8] sm:$0xff] %vm170, %v306
        %339 = vst.msk [vmem:[#allocation3 + $0xd0] sm:$0xff] %vm170, %v307
        %340 = vst.msk [vmem:[#allocation3 + $0xd8] sm:$0xff] %vm170, %v308
        %341 = vst.msk [vmem:[#allocation3 + $0xe0] sm:$0xff] %vm170, %v309
        %342 = vst.msk [vmem:[#allocation3 + $0xe8] sm:$0xff] %vm170, %v310
        %343 = vst.msk [vmem:[#allocation3 + $0xf0] sm:$0xff] %vm170, %v311
        %344 = vst.msk [vmem:[#allocation3 + $0xf8] sm:$0xff] %vm170, %v312
        %v345 = vld [vmem:[#allocation2 + $0x1] sm:$0xff]
        %v346 = vld [vmem:[#allocation2 + $0x9] sm:$0xff]
        %v347 = vld [vmem:[#allocation2 + $0x19] sm:$0xff]
        %v348 = vld [vmem:[#allocation2 + $0x21] sm:$0xff]
        %v349 = vld [vmem:[#allocation2 + $0x31] sm:$0xff]
        %v350 = vld [vmem:[#allocation2 + $0x39] sm:$0xff]
        %v351 = vld [vmem:[#allocation2 + $0x49] sm:$0xff]
        %v352 = vld [vmem:[#allocation2 + $0x51] sm:$0xff]
        %v353 = vld [vmem:[#allocation2 + $0x61] sm:$0xff]
        %v354 = vld [vmem:[#allocation2 + $0x69] sm:$0xff]
        %v355 = vld [vmem:[#allocation2 + $0x79] sm:$0xff]
        %v356 = vld [vmem:[#allocation2 + $0x81] sm:$0xff]
        %v357 = vld [vmem:[#allocation2 + $0x91] sm:$0xff]
        %v358 = vld [vmem:[#allocation2 + $0x99] sm:$0xff]
        %v359 = vld [vmem:[#allocation2 + $0xa9] sm:$0xff]
        %v360 = vld [vmem:[#allocation2 + $0xb1] sm:$0xff]
        %v361 = vld [vmem:[#allocation2 + $0xc1] sm:$0xff]
        %v362 = vld [vmem:[#allocation2 + $0xc9] sm:$0xff]
        %v363 = vld [vmem:[#allocation2 + $0xd9] sm:$0xff]
        %v364 = vld [vmem:[#allocation2 + $0xe1] sm:$0xff]
        %v365 = vld [vmem:[#allocation2 + $0xf1] sm:$0xff]
        %v366 = vld [vmem:[#allocation2 + $0xf9] sm:$0xff]
        %v367 = vld [vmem:[#allocation2 + $0x109] sm:$0xff]
        %v368 = vld [vmem:[#allocation2 + $0x111] sm:$0xff]
        %v369 = vld [vmem:[#allocation2 + $0x121] sm:$0xff]
        %v370 = vld [vmem:[#allocation2 + $0x129] sm:$0xff]
        %v371 = vld [vmem:[#allocation2 + $0x139] sm:$0xff]
        %v372 = vld [vmem:[#allocation2 + $0x141] sm:$0xff]
        %v373 = vld [vmem:[#allocation2 + $0x151] sm:$0xff]
        %v374 = vld [vmem:[#allocation2 + $0x159] sm:$0xff]
        %v375 = vld [vmem:[#allocation2 + $0x169] sm:$0xff]
        %v376 = vld [vmem:[#allocation2 + $0x171] sm:$0xff]
        %409 = vrot.lane.b32.xlu0 %v345, 4
        %v410 = vpop.permute.xlu0 %409
        %411 = vrot.lane.b32.xlu0 %v346, 4
        %v412 = vpop.permute.xlu0 %411
        %413 = vrot.lane.b32.xlu0 %v347, 4
        %v414 = vpop.permute.xlu0 %413
        %415 = vrot.lane.b32.xlu0 %v348, 4
        %v416 = vpop.permute.xlu0 %415
        %417 = vrot.lane.b32.xlu0 %v349, 4
        %v418 = vpop.permute.xlu0 %417
        %419 = vrot.lane.b32.xlu0 %v350, 4
        %v420 = vpop.permute.xlu0 %419
        %421 = vrot.lane.b32.xlu0 %v351, 4
        %v422 = vpop.permute.xlu0 %421
        %423 = vrot.lane.b32.xlu0 %v352, 4
        %v424 = vpop.permute.xlu0 %423
        %425 = vrot.lane.b32.xlu0 %v353, 4
        %v426 = vpop.permute.xlu0 %425
        %427 = vrot.lane.b32.xlu0 %v354, 4
        %v428 = vpop.permute.xlu0 %427
        %429 = vrot.lane.b32.xlu0 %v355, 4
        %v430 = vpop.permute.xlu0 %429
        %431 = vrot.lane.b32.xlu0 %v356, 4
        %v432 = vpop.permute.xlu0 %431
        %433 = vrot.lane.b32.xlu0 %v357, 4
        %v434 = vpop.permute.xlu0 %433
        %435 = vrot.lane.b32.xlu0 %v358, 4
        %v436 = vpop.permute.xlu0 %435
        %437 = vrot.lane.b32.xlu0 %v359, 4
        %v438 = vpop.permute.xlu0 %437
        %439 = vrot.lane.b32.xlu0 %v360, 4
        %v440 = vpop.permute.xlu0 %439
        %441 = vrot.lane.b32.xlu0 %v361, 4
        %v442 = vpop.permute.xlu0 %441
        %443 = vrot.lane.b32.xlu0 %v362, 4
        %v444 = vpop.permute.xlu0 %443
        %445 = vrot.lane.b32.xlu0 %v363, 4
        %v446 = vpop.permute.xlu0 %445
        %447 = vrot.lane.b32.xlu0 %v364, 4
        %v448 = vpop.permute.xlu0 %447
        %449 = vrot.lane.b32.xlu0 %v365, 4
        %v450 = vpop.permute.xlu0 %449
        %451 = vrot.lane.b32.xlu0 %v366, 4
        %v452 = vpop.permute.xlu0 %451
        %453 = vrot.lane.b32.xlu0 %v367, 4
        %v454 = vpop.permute.xlu0 %453
        %455 = vrot.lane.b32.xlu0 %v368, 4
        %v456 = vpop.permute.xlu0 %455
        %457 = vrot.lane.b32.xlu0 %v369, 4
        %v458 = vpop.permute.xlu0 %457
        %459 = vrot.lane.b32.xlu0 %v370, 4
        %v460 = vpop.permute.xlu0 %459
        %461 = vrot.lane.b32.xlu0 %v371, 4
        %v462 = vpop.permute.xlu0 %461
        %463 = vrot.lane.b32.xlu0 %v372, 4
        %v464 = vpop.permute.xlu0 %463
        %465 = vrot.lane.b32.xlu0 %v373, 4
        %v466 = vpop.permute.xlu0 %465
        %467 = vrot.lane.b32.xlu0 %v374, 4
        %v468 = vpop.permute.xlu0 %467
        %469 = vrot.lane.b32.xlu0 %v375, 4
        %v470 = vpop.permute.xlu0 %469
        %471 = vrot.lane.b32.xlu0 %v376, 4
        %v472 = vpop.permute.xlu0 %471
        %vm505 = vcmask 64544
        %506 = vst.msk [vmem:[#allocation3] sm:$0xff] %vm505, %v410
        %507 = vst.msk [vmem:[#allocation3 + $0x8] sm:$0xff] %vm505, %v412
        %508 = vst.msk [vmem:[#allocation3 + $0x10] sm:$0xff] %vm505, %v414
        %509 = vst.msk [vmem:[#allocation3 + $0x18] sm:$0xff] %vm505, %v416
        %510 = vst.msk [vmem:[#allocation3 + $0x20] sm:$0xff] %vm505, %v418
        %511 = vst.msk [vmem:[#allocation3 + $0x28] sm:$0xff] %vm505, %v420
        %512 = vst.msk [vmem:[#allocation3 + $0x30] sm:$0xff] %vm505, %v422
        %513 = vst.msk [vmem:[#allocation3 + $0x38] sm:$0xff] %vm505, %v424
        %514 = vst.msk [vmem:[#allocation3 + $0x40] sm:$0xff] %vm505, %v426
        %515 = vst.msk [vmem:[#allocation3 + $0x48] sm:$0xff] %vm505, %v428
        %516 = vst.msk [vmem:[#allocation3 + $0x50] sm:$0xff] %vm505, %v430
        %517 = vst.msk [vmem:[#allocation3 + $0x58] sm:$0xff] %vm505, %v432
        %518 = vst.msk [vmem:[#allocation3 + $0x60] sm:$0xff] %vm505, %v434
        %519 = vst.msk [vmem:[#allocation3 + $0x68] sm:$0xff] %vm505, %v436
        %520 = vst.msk [vmem:[#allocation3 + $0x70] sm:$0xff] %vm505, %v438
        %521 = vst.msk [vmem:[#allocation3 + $0x78] sm:$0xff] %vm505, %v440
        %522 = vst.msk [vmem:[#allocation3 + $0x80] sm:$0xff] %vm505, %v442
        %523 = vst.msk [vmem:[#allocation3 + $0x88] sm:$0xff] %vm505, %v444
        %524 = vst.msk [vmem:[#allocation3 + $0x90] sm:$0xff] %vm505, %v446
        %525 = vst.msk [vmem:[#allocation3 + $0x98] sm:$0xff] %vm505, %v448
        %526 = vst.msk [vmem:[#allocation3 + $0xa0] sm:$0xff] %vm505, %v450
        %527 = vst.msk [vmem:[#allocation3 + $0xa8] sm:$0xff] %vm505, %v452
        %528 = vst.msk [vmem:[#allocation3 + $0xb0] sm:$0xff] %vm505, %v454
        %529 = vst.msk [vmem:[#allocation3 + $0xb8] sm:$0xff] %vm505, %v456
        %530 = vst.msk [vmem:[#allocation3 + $0xc0] sm:$0xff] %vm505, %v458
        %531 = vst.msk [vmem:[#allocation3 + $0xc8] sm:$0xff] %vm505, %v460
        %532 = vst.msk [vmem:[#allocation3 + $0xd0] sm:$0xff] %vm505, %v462
        %533 = vst.msk [vmem:[#allocation3 + $0xd8] sm:$0xff] %vm505, %v464
        %534 = vst.msk [vmem:[#allocation3 + $0xe0] sm:$0xff] %vm505, %v466
        %535 = vst.msk [vmem:[#allocation3 + $0xe8] sm:$0xff] %vm505, %v468
        %536 = vst.msk [vmem:[#allocation3 + $0xf0] sm:$0xff] %vm505, %v470
        %537 = vst.msk [vmem:[#allocation3 + $0xf8] sm:$0xff] %vm505, %v472
        %v538 = vld [vmem:[#allocation2 + $0x2] sm:$0xff]
        %v539 = vld [vmem:[#allocation2 + $0xa] sm:$0xff]
        %v540 = vld [vmem:[#allocation2 + $0x1a] sm:$0xff]
        %v541 = vld [vmem:[#allocation2 + $0x22] sm:$0xff]
        %v542 = vld [vmem:[#allocation2 + $0x32] sm:$0xff]
        %v543 = vld [vmem:[#allocation2 + $0x3a] sm:$0xff]
        %v544 = vld [vmem:[#allocation2 + $0x4a] sm:$0xff]
        %v545 = vld [vmem:[#allocation2 + $0x52] sm:$0xff]
        %v546 = vld [vmem:[#allocation2 + $0x62] sm:$0xff]
        %v547 = vld [vmem:[#allocation2 + $0x6a] sm:$0xff]
        %v548 = vld [vmem:[#allocation2 + $0x7a] sm:$0xff]
        %v549 = vld [vmem:[#allocation2 + $0x82] sm:$0xff]
        %v550 = vld [vmem:[#allocation2 + $0x92] sm:$0xff]
        %v551 = vld [vmem:[#allocation2 + $0x9a] sm:$0xff]
        %v552 = vld [vmem:[#allocation2 + $0xaa] sm:$0xff]
        %v553 = vld [vmem:[#allocation2 + $0xb2] sm:$0xff]
        %v554 = vld [vmem:[#allocation2 + $0xc2] sm:$0xff]
        %v555 = vld [vmem:[#allocation2 + $0xca] sm:$0xff]
        %v556 = vld [vmem:[#allocation2 + $0xda] sm:$0xff]
        %v557 = vld [vmem:[#allocation2 + $0xe2] sm:$0xff]
        %v558 = vld [vmem:[#allocation2 + $0xf2] sm:$0xff]
        %v559 = vld [vmem:[#allocation2 + $0xfa] sm:$0xff]
        %v560 = vld [vmem:[#allocation2 + $0x10a] sm:$0xff]
        %v561 = vld [vmem:[#allocation2 + $0x112] sm:$0xff]
        %v562 = vld [vmem:[#allocation2 + $0x122] sm:$0xff]
        %v563 = vld [vmem:[#allocation2 + $0x12a] sm:$0xff]
        %v564 = vld [vmem:[#allocation2 + $0x13a] sm:$0xff]
        %v565 = vld [vmem:[#allocation2 + $0x142] sm:$0xff]
        %v566 = vld [vmem:[#allocation2 + $0x152] sm:$0xff]
        %v567 = vld [vmem:[#allocation2 + $0x15a] sm:$0xff]
        %v568 = vld [vmem:[#allocation2 + $0x16a] sm:$0xff]
        %v569 = vld [vmem:[#allocation2 + $0x172] sm:$0xff]
        %602 = vrot.lane.b32.xlu0 %v538, 8
        %v603 = vpop.permute.xlu0 %602
        %604 = vrot.lane.b32.xlu0 %v539, 8
        %v605 = vpop.permute.xlu0 %604
        %606 = vrot.lane.b32.xlu0 %v540, 8
        %v607 = vpop.permute.xlu0 %606
        %608 = vrot.lane.b32.xlu0 %v541, 8
        %v609 = vpop.permute.xlu0 %608
        %610 = vrot.lane.b32.xlu0 %v542, 8
        %v611 = vpop.permute.xlu0 %610
        %612 = vrot.lane.b32.xlu0 %v543, 8
        %v613 = vpop.permute.xlu0 %612
        %614 = vrot.lane.b32.xlu0 %v544, 8
        %v615 = vpop.permute.xlu0 %614
        %616 = vrot.lane.b32.xlu0 %v545, 8
        %v617 = vpop.permute.xlu0 %616
        %618 = vrot.lane.b32.xlu0 %v546, 8
        %v619 = vpop.permute.xlu0 %618
        %620 = vrot.lane.b32.xlu0 %v547, 8
        %v621 = vpop.permute.xlu0 %620
        %622 = vrot.lane.b32.xlu0 %v548, 8
        %v623 = vpop.permute.xlu0 %622
        %624 = vrot.lane.b32.xlu0 %v549, 8
        %v625 = vpop.permute.xlu0 %624
        %626 = vrot.lane.b32.xlu0 %v550, 8
        %v627 = vpop.permute.xlu0 %626
        %628 = vrot.lane.b32.xlu0 %v551, 8
        %v629 = vpop.permute.xlu0 %628
        %630 = vrot.lane.b32.xlu0 %v552, 8
        %v631 = vpop.permute.xlu0 %630
        %632 = vrot.lane.b32.xlu0 %v553, 8
        %v633 = vpop.permute.xlu0 %632
        %634 = vrot.lane.b32.xlu0 %v554, 8
        %v635 = vpop.permute.xlu0 %634
        %636 = vrot.lane.b32.xlu0 %v555, 8
        %v637 = vpop.permute.xlu0 %636
        %638 = vrot.lane.b32.xlu0 %v556, 8
        %v639 = vpop.permute.xlu0 %638
        %640 = vrot.lane.b32.xlu0 %v557, 8
        %v641 = vpop.permute.xlu0 %640
        %642 = vrot.lane.b32.xlu0 %v558, 8
        %v643 = vpop.permute.xlu0 %642
        %644 = vrot.lane.b32.xlu0 %v559, 8
        %v645 = vpop.permute.xlu0 %644
        %646 = vrot.lane.b32.xlu0 %v560, 8
        %v647 = vpop.permute.xlu0 %646
        %648 = vrot.lane.b32.xlu0 %v561, 8
        %v649 = vpop.permute.xlu0 %648
        %650 = vrot.lane.b32.xlu0 %v562, 8
        %v651 = vpop.permute.xlu0 %650
        %652 = vrot.lane.b32.xlu0 %v563, 8
        %v653 = vpop.permute.xlu0 %652
        %654 = vrot.lane.b32.xlu0 %v564, 8
        %v655 = vpop.permute.xlu0 %654
        %656 = vrot.lane.b32.xlu0 %v565, 8
        %v657 = vpop.permute.xlu0 %656
        %658 = vrot.lane.b32.xlu0 %v566, 8
        %v659 = vpop.permute.xlu0 %658
        %660 = vrot.lane.b32.xlu0 %v567, 8
        %v661 = vpop.permute.xlu0 %660
        %662 = vrot.lane.b32.xlu0 %v568, 8
        %v663 = vpop.permute.xlu0 %662
        %664 = vrot.lane.b32.xlu0 %v569, 8
        %v665 = vpop.permute.xlu0 %664
        %vm698 = vcmask 97344
        %699 = vst.msk [vmem:[#allocation3] sm:$0xff] %vm698, %v603
        %700 = vst.msk [vmem:[#allocation3 + $0x8] sm:$0xff] %vm698, %v605
        %701 = vst.msk [vmem:[#allocation3 + $0x10] sm:$0xff] %vm698, %v607
        %702 = vst.msk [vmem:[#allocation3 + $0x18] sm:$0xff] %vm698, %v609
        %703 = vst.msk [vmem:[#allocation3 + $0x20] sm:$0xff] %vm698, %v611
        %704 = vst.msk [vmem:[#allocation3 + $0x28] sm:$0xff] %vm698, %v613
        %705 = vst.msk [vmem:[#allocation3 + $0x30] sm:$0xff] %vm698, %v615
        %706 = vst.msk [vmem:[#allocation3 + $0x38] sm:$0xff] %vm698, %v617
        %707 = vst.msk [vmem:[#allocation3 + $0x40] sm:$0xff] %vm698, %v619
        %708 = vst.msk [vmem:[#allocation3 + $0x48] sm:$0xff] %vm698, %v621
        %709 = vst.msk [vmem:[#allocation3 + $0x50] sm:$0xff] %vm698, %v623
        %710 = vst.msk [vmem:[#allocation3 + $0x58] sm:$0xff] %vm698, %v625
        %711 = vst.msk [vmem:[#allocation3 + $0x60] sm:$0xff] %vm698, %v627
        %712 = vst.msk [vmem:[#allocation3 + $0x68] sm:$0xff] %vm698, %v629
        %713 = vst.msk [vmem:[#allocation3 + $0x70] sm:$0xff] %vm698, %v631
        %714 = vst.msk [vmem:[#allocation3 + $0x78] sm:$0xff] %vm698, %v633
        %715 = vst.msk [vmem:[#allocation3 + $0x80] sm:$0xff] %vm698, %v635
        %716 = vst.msk [vmem:[#allocation3 + $0x88] sm:$0xff] %vm698, %v637
        %717 = vst.msk [vmem:[#allocation3 + $0x90] sm:$0xff] %vm698, %v639
        %718 = vst.msk [vmem:[#allocation3 + $0x98] sm:$0xff] %vm698, %v641
        %719 = vst.msk [vmem:[#allocation3 + $0xa0] sm:$0xff] %vm698, %v643
        %720 = vst.msk [vmem:[#allocation3 + $0xa8] sm:$0xff] %vm698, %v645
        %721 = vst.msk [vmem:[#allocation3 + $0xb0] sm:$0xff] %vm698, %v647
        %722 = vst.msk [vmem:[#allocation3 + $0xb8] sm:$0xff] %vm698, %v649
        %723 = vst.msk [vmem:[#allocation3 + $0xc0] sm:$0xff] %vm698, %v651
        %724 = vst.msk [vmem:[#allocation3 + $0xc8] sm:$0xff] %vm698, %v653
        %725 = vst.msk [vmem:[#allocation3 + $0xd0] sm:$0xff] %vm698, %v655
        %726 = vst.msk [vmem:[#allocation3 + $0xd8] sm:$0xff] %vm698, %v657
        %727 = vst.msk [vmem:[#allocation3 + $0xe0] sm:$0xff] %vm698, %v659
        %728 = vst.msk [vmem:[#allocation3 + $0xe8] sm:$0xff] %vm698, %v661
        %729 = vst.msk [vmem:[#allocation3 + $0xf0] sm:$0xff] %vm698, %v663
        %730 = vst.msk [vmem:[#allocation3 + $0xf8] sm:$0xff] %vm698, %v665
        %v731 = vld [vmem:[%s248] sm:$0xff]
        %v732 = vld [vmem:[%s248 + $0x8] sm:$0xff]
        %v733 = vld [vmem:[%s248 + $0x18] sm:$0xff]
        %v734 = vld [vmem:[%s248 + $0x20] sm:$0xff]
        %v735 = vld [vmem:[%s248 + $0x30] sm:$0xff]
        %v736 = vld [vmem:[%s248 + $0x38] sm:$0xff]
        %v737 = vld [vmem:[%s248 + $0x48] sm:$0xff]
        %v738 = vld [vmem:[%s248 + $0x50] sm:$0xff]
        %v739 = vld [vmem:[%s248 + $0x60] sm:$0xff]
        %v740 = vld [vmem:[%s248 + $0x68] sm:$0xff]
        %v741 = vld [vmem:[%s248 + $0x78] sm:$0xff]
        %v742 = vld [vmem:[%s248 + $0x80] sm:$0xff]
        %v743 = vld [vmem:[%s248 + $0x90] sm:$0xff]
        %v744 = vld [vmem:[%s248 + $0x98] sm:$0xff]
        %v745 = vld [vmem:[%s248 + $0xa8] sm:$0xff]
        %v746 = vld [vmem:[%s248 + $0xb0] sm:$0xff]
        %v747 = vld [vmem:[%s248 + $0xc0] sm:$0xff]
        %v748 = vld [vmem:[%s248 + $0xc8] sm:$0xff]
        %v749 = vld [vmem:[%s248 + $0xd8] sm:$0xff]
        %v750 = vld [vmem:[%s248 + $0xe0] sm:$0xff]
        %v751 = vld [vmem:[%s248 + $0xf0] sm:$0xff]
        %v752 = vld [vmem:[%s248 + $0xf8] sm:$0xff]
        %v753 = vld [vmem:[%s248 + $0x108] sm:$0xff]
        %v754 = vld [vmem:[%s248 + $0x110] sm:$0xff]
        %v755 = vld [vmem:[%s248 + $0x120] sm:$0xff]
        %v756 = vld [vmem:[%s248 + $0x128] sm:$0xff]
        %v757 = vld [vmem:[%s248 + $0x138] sm:$0xff]
        %v758 = vld [vmem:[%s248 + $0x140] sm:$0xff]
        %v759 = vld [vmem:[%s248 + $0x150] sm:$0xff]
        %v760 = vld [vmem:[%s248 + $0x158] sm:$0xff]
        %v761 = vld [vmem:[%s248 + $0x168] sm:$0xff]
        %v762 = vld [vmem:[%s248 + $0x170] sm:$0xff]
        %795 = vrot.lane.b32.xlu0 %v731, 12
        %v796 = vpop.permute.xlu0 %795
        %797 = vrot.lane.b32.xlu0 %v732, 12
        %v798 = vpop.permute.xlu0 %797
        %799 = vrot.lane.b32.xlu0 %v733, 12
        %v800 = vpop.permute.xlu0 %799
        %801 = vrot.lane.b32.xlu0 %v734, 12
        %v802 = vpop.permute.xlu0 %801
        %803 = vrot.lane.b32.xlu0 %v735, 12
        %v804 = vpop.permute.xlu0 %803
        %805 = vrot.lane.b32.xlu0 %v736, 12
        %v806 = vpop.permute.xlu0 %805
        %807 = vrot.lane.b32.xlu0 %v737, 12
        %v808 = vpop.permute.xlu0 %807
        %809 = vrot.lane.b32.xlu0 %v738, 12
        %v810 = vpop.permute.xlu0 %809
        %811 = vrot.lane.b32.xlu0 %v739, 12
        %v812 = vpop.permute.xlu0 %811
        %813 = vrot.lane.b32.xlu0 %v740, 12
        %v814 = vpop.permute.xlu0 %813
        %815 = vrot.lane.b32.xlu0 %v741, 12
        %v816 = vpop.permute.xlu0 %815
        %817 = vrot.lane.b32.xlu0 %v742, 12
        %v818 = vpop.permute.xlu0 %817
        %819 = vrot.lane.b32.xlu0 %v743, 12
        %v820 = vpop.permute.xlu0 %819
        %821 = vrot.lane.b32.xlu0 %v744, 12
        %v822 = vpop.permute.xlu0 %821
        %823 = vrot.lane.b32.xlu0 %v745, 12
        %v824 = vpop.permute.xlu0 %823
        %825 = vrot.lane.b32.xlu0 %v746, 12
        %v826 = vpop.permute.xlu0 %825
        %827 = vrot.lane.b32.xlu0 %v747, 12
        %v828 = vpop.permute.xlu0 %827
        %829 = vrot.lane.b32.xlu0 %v748, 12
        %v830 = vpop.permute.xlu0 %829
        %831 = vrot.lane.b32.xlu0 %v749, 12
        %v832 = vpop.permute.xlu0 %831
        %833 = vrot.lane.b32.xlu0 %v750, 12
        %v834 = vpop.permute.xlu0 %833
        %835 = vrot.lane.b32.xlu0 %v751, 12
        %v836 = vpop.permute.xlu0 %835
        %837 = vrot.lane.b32.xlu0 %v752, 12
        %v838 = vpop.permute.xlu0 %837
        %839 = vrot.lane.b32.xlu0 %v753, 12
        %v840 = vpop.permute.xlu0 %839
        %841 = vrot.lane.b32.xlu0 %v754, 12
        %v842 = vpop.permute.xlu0 %841
        %843 = vrot.lane.b32.xlu0 %v755, 12
        %v844 = vpop.permute.xlu0 %843
        %845 = vrot.lane.b32.xlu0 %v756, 12
        %v846 = vpop.permute.xlu0 %845
        %847 = vrot.lane.b32.xlu0 %v757, 12
        %v848 = vpop.permute.xlu0 %847
        %849 = vrot.lane.b32.xlu0 %v758, 12
        %v850 = vpop.permute.xlu0 %849
        %851 = vrot.lane.b32.xlu0 %v759, 12
        %v852 = vpop.permute.xlu0 %851
        %853 = vrot.lane.b32.xlu0 %v760, 12
        %v854 = vpop.permute.xlu0 %853
        %855 = vrot.lane.b32.xlu0 %v761, 12
        %v856 = vpop.permute.xlu0 %855
        %857 = vrot.lane.b32.xlu0 %v762, 12
        %v858 = vpop.permute.xlu0 %857
        %vm891 = vcmask 130144
        %892 = vst.msk [vmem:[#allocation3] sm:$0xff] %vm891, %v796
        %893 = vst.msk [vmem:[#allocation3 + $0x8] sm:$0xff] %vm891, %v798
        %894 = vst.msk [vmem:[#allocation3 + $0x10] sm:$0xff] %vm891, %v800
        %895 = vst.msk [vmem:[#allocation3 + $0x18] sm:$0xff] %vm891, %v802
        %896 = vst.msk [vmem:[#allocation3 + $0x20] sm:$0xff] %vm891, %v804
        %897 = vst.msk [vmem:[#allocation3 + $0x28] sm:$0xff] %vm891, %v806
        %898 = vst.msk [vmem:[#allocation3 + $0x30] sm:$0xff] %vm891, %v808
        %899 = vst.msk [vmem:[#allocation3 + $0x38] sm:$0xff] %vm891, %v810
        %900 = vst.msk [vmem:[#allocation3 + $0x40] sm:$0xff] %vm891, %v812
        %901 = vst.msk [vmem:[#allocation3 + $0x48] sm:$0xff] %vm891, %v814
        %902 = vst.msk [vmem:[#allocation3 + $0x50] sm:$0xff] %vm891, %v816
        %903 = vst.msk [vmem:[#allocation3 + $0x58] sm:$0xff] %vm891, %v818
        %904 = vst.msk [vmem:[#allocation3 + $0x60] sm:$0xff] %vm891, %v820
        %905 = vst.msk [vmem:[#allocation3 + $0x68] sm:$0xff] %vm891, %v822
        %906 = vst.msk [vmem:[#allocation3 + $0x70] sm:$0xff] %vm891, %v824
        %907 = vst.msk [vmem:[#allocation3 + $0x78] sm:$0xff] %vm891, %v826
        %908 = vst.msk [vmem:[#allocation3 + $0x80] sm:$0xff] %vm891, %v828
        %909 = vst.msk [vmem:[#allocation3 + $0x88] sm:$0xff] %vm891, %v830
        %910 = vst.msk [vmem:[#allocation3 + $0x90] sm:$0xff] %vm891, %v832
        %911 = vst.msk [vmem:[#allocation3 + $0x98] sm:$0xff] %vm891, %v834
        %912 = vst.msk [vmem:[#allocation3 + $0xa0] sm:$0xff] %vm891, %v836
        %913 = vst.msk [vmem:[#allocation3 + $0xa8] sm:$0xff] %vm891, %v838
        %914 = vst.msk [vmem:[#allocation3 + $0xb0] sm:$0xff] %vm891, %v840
        %915 = vst.msk [vmem:[#allocation3 + $0xb8] sm:$0xff] %vm891, %v842
        %916 = vst.msk [vmem:[#allocation3 + $0xc0] sm:$0xff] %vm891, %v844
        %917 = vst.msk [vmem:[#allocation3 + $0xc8] sm:$0xff] %vm891, %v846
        %918 = vst.msk [vmem:[#allocation3 + $0xd0] sm:$0xff] %vm891, %v848
        %919 = vst.msk [vmem:[#allocation3 + $0xd8] sm:$0xff] %vm891, %v850
        %920 = vst.msk [vmem:[#allocation3 + $0xe0] sm:$0xff] %vm891, %v852
        %921 = vst.msk [vmem:[#allocation3 + $0xe8] sm:$0xff] %vm891, %v854
        %922 = vst.msk [vmem:[#allocation3 + $0xf0] sm:$0xff] %vm891, %v856
        %923 = vst.msk [vmem:[#allocation3 + $0xf8] sm:$0xff] %vm891, %v858
        %v924 = vld [vmem:[%s248 + $0x1] sm:$0xff]
        %v925 = vld [vmem:[%s248 + $0x9] sm:$0xff]
        %v926 = vld [vmem:[%s248 + $0x19] sm:$0xff]
        %v927 = vld [vmem:[%s248 + $0x21] sm:$0xff]
        %v928 = vld [vmem:[%s248 + $0x31] sm:$0xff]
        %v929 = vld [vmem:[%s248 + $0x39] sm:$0xff]
        %v930 = vld [vmem:[%s248 + $0x49] sm:$0xff]
        %v931 = vld [vmem:[%s248 + $0x51] sm:$0xff]
        %v932 = vld [vmem:[%s248 + $0x61] sm:$0xff]
        %v933 = vld [vmem:[%s248 + $0x69] sm:$0xff]
        %v934 = vld [vmem:[%s248 + $0x79] sm:$0xff]
        %v935 = vld [vmem:[%s248 + $0x81] sm:$0xff]
        %v936 = vld [vmem:[%s248 + $0x91] sm:$0xff]
        %v937 = vld [vmem:[%s248 + $0x99] sm:$0xff]
        %v938 = vld [vmem:[%s248 + $0xa9] sm:$0xff]
        %v939 = vld [vmem:[%s248 + $0xb1] sm:$0xff]
        %v940 = vld [vmem:[%s248 + $0xc1] sm:$0xff]
        %v941 = vld [vmem:[%s248 + $0xc9] sm:$0xff]
        %v942 = vld [vmem:[%s248 + $0xd9] sm:$0xff]
        %v943 = vld [vmem:[%s248 + $0xe1] sm:$0xff]
        %v944 = vld [vmem:[%s248 + $0xf1] sm:$0xff]
        %v945 = vld [vmem:[%s248 + $0xf9] sm:$0xff]
        %v946 = vld [vmem:[%s248 + $0x109] sm:$0xff]
        %v947 = vld [vmem:[%s248 + $0x111] sm:$0xff]
        %v948 = vld [vmem:[%s248 + $0x121] sm:$0xff]
        %v949 = vld [vmem:[%s248 + $0x129] sm:$0xff]
        %v950 = vld [vmem:[%s248 + $0x139] sm:$0xff]
        %v951 = vld [vmem:[%s248 + $0x141] sm:$0xff]
        %v952 = vld [vmem:[%s248 + $0x151] sm:$0xff]
        %v953 = vld [vmem:[%s248 + $0x159] sm:$0xff]
        %v954 = vld [vmem:[%s248 + $0x169] sm:$0xff]
        %v955 = vld [vmem:[%s248 + $0x171] sm:$0xff]
        %988 = vrot.lane.b32.xlu0 %v924, 16
        %v989 = vpop.permute.xlu0 %988
        %990 = vrot.lane.b32.xlu0 %v925, 16
        %v991 = vpop.permute.xlu0 %990
        %992 = vrot.lane.b32.xlu0 %v926, 16
        %v993 = vpop.permute.xlu0 %992
        %994 = vrot.lane.b32.xlu0 %v927, 16
        %v995 = vpop.permute.xlu0 %994
        %996 = vrot.lane.b32.xlu0 %v928, 16
        %v997 = vpop.permute.xlu0 %996
        %998 = vrot.lane.b32.xlu0 %v929, 16
        %v999 = vpop.permute.xlu0 %998
        %1000 = vrot.lane.b32.xlu0 %v930, 16
        %v1001 = vpop.permute.xlu0 %1000
        %1002 = vrot.lane.b32.xlu0 %v931, 16
        %v1003 = vpop.permute.xlu0 %1002
        %1004 = vrot.lane.b32.xlu0 %v932, 16
        %v1005 = vpop.permute.xlu0 %1004
        %1006 = vrot.lane.b32.xlu0 %v933, 16
        %v1007 = vpop.permute.xlu0 %1006
        %1008 = vrot.lane.b32.xlu0 %v934, 16
        %v1009 = vpop.permute.xlu0 %1008
        %1010 = vrot.lane.b32.xlu0 %v935, 16
        %v1011 = vpop.permute.xlu0 %1010
        %1012 = vrot.lane.b32.xlu0 %v936, 16
        %v1013 = vpop.permute.xlu0 %1012
        %1014 = vrot.lane.b32.xlu0 %v937, 16
        %v1015 = vpop.permute.xlu0 %1014
        %1016 = vrot.lane.b32.xlu0 %v938, 16
        %v1017 = vpop.permute.xlu0 %1016
        %1018 = vrot.lane.b32.xlu0 %v939, 16
        %v1019 = vpop.permute.xlu0 %1018
        %1020 = vrot.lane.b32.xlu0 %v940, 16
        %v1021 = vpop.permute.xlu0 %1020
        %1022 = vrot.lane.b32.xlu0 %v941, 16
        %v1023 = vpop.permute.xlu0 %1022
        %1024 = vrot.lane.b32.xlu0 %v942, 16
        %v1025 = vpop.permute.xlu0 %1024
        %1026 = vrot.lane.b32.xlu0 %v943, 16
        %v1027 = vpop.permute.xlu0 %1026
        %1028 = vrot.lane.b32.xlu0 %v944, 16
        %v1029 = vpop.permute.xlu0 %1028
        %1030 = vrot.lane.b32.xlu0 %v945, 16
        %v1031 = vpop.permute.xlu0 %1030
        %1032 = vrot.lane.b32.xlu0 %v946, 16
        %v1033 = vpop.permute.xlu0 %1032
        %1034 = vrot.lane.b32.xlu0 %v947, 16
        %v1035 = vpop.permute.xlu0 %1034
        %1036 = vrot.lane.b32.xlu0 %v948, 16
        %v1037 = vpop.permute.xlu0 %1036
        %1038 = vrot.lane.b32.xlu0 %v949, 16
        %v1039 = vpop.permute.xlu0 %1038
        %1040 = vrot.lane.b32.xlu0 %v950, 16
        %v1041 = vpop.permute.xlu0 %1040
        %1042 = vrot.lane.b32.xlu0 %v951, 16
        %v1043 = vpop.permute.xlu0 %1042
        %1044 = vrot.lane.b32.xlu0 %v952, 16
        %v1045 = vpop.permute.xlu0 %1044
        %1046 = vrot.lane.b32.xlu0 %v953, 16
        %v1047 = vpop.permute.xlu0 %1046
        %1048 = vrot.lane.b32.xlu0 %v954, 16
        %v1049 = vpop.permute.xlu0 %1048
        %1050 = vrot.lane.b32.xlu0 %v955, 16
        %v1051 = vpop.permute.xlu0 %1050
        %vm1084 = vcmask 162944
        %1085 = vst.msk [vmem:[#allocation3] sm:$0xff] %vm1084, %v989
        %1086 = vst.msk [vmem:[#allocation3 + $0x8] sm:$0xff] %vm1084, %v991
        %1087 = vst.msk [vmem:[#allocation3 + $0x10] sm:$0xff] %vm1084, %v993
        %1088 = vst.msk [vmem:[#allocation3 + $0x18] sm:$0xff] %vm1084, %v995
        %1089 = vst.msk [vmem:[#allocation3 + $0x20] sm:$0xff] %vm1084, %v997
        %1090 = vst.msk [vmem:[#allocation3 + $0x28] sm:$0xff] %vm1084, %v999
        %1091 = vst.msk [vmem:[#allocation3 + $0x30] sm:$0xff] %vm1084, %v1001
        %1092 = vst.msk [vmem:[#allocation3 + $0x38] sm:$0xff] %vm1084, %v1003
        %1093 = vst.msk [vmem:[#allocation3 + $0x40] sm:$0xff] %vm1084, %v1005
        %1094 = vst.msk [vmem:[#allocation3 + $0x48] sm:$0xff] %vm1084, %v1007
        %1095 = vst.msk [vmem:[#allocation3 + $0x50] sm:$0xff] %vm1084, %v1009
        %1096 = vst.msk [vmem:[#allocation3 + $0x58] sm:$0xff] %vm1084, %v1011
        %1097 = vst.msk [vmem:[#allocation3 + $0x60] sm:$0xff] %vm1084, %v1013
        %1098 = vst.msk [vmem:[#allocation3 + $0x68] sm:$0xff] %vm1084, %v1015
        %1099 = vst.msk [vmem:[#allocation3 + $0x70] sm:$0xff] %vm1084, %v1017
        %1100 = vst.msk [vmem:[#allocation3 + $0x78] sm:$0xff] %vm1084, %v1019
        %1101 = vst.msk [vmem:[#allocation3 + $0x80] sm:$0xff] %vm1084, %v1021
        %1102 = vst.msk [vmem:[#allocation3 + $0x88] sm:$0xff] %vm1084, %v1023
        %1103 = vst.msk [vmem:[#allocation3 + $0x90] sm:$0xff] %vm1084, %v1025
        %1104 = vst.msk [vmem:[#allocation3 + $0x98] sm:$0xff] %vm1084, %v1027
        %1105 = vst.msk [vmem:[#allocation3 + $0xa0] sm:$0xff] %vm1084, %v1029
        %1106 = vst.msk [vmem:[#allocation3 + $0xa8] sm:$0xff] %vm1084, %v1031
        %1107 = vst.msk [vmem:[#allocation3 + $0xb0] sm:$0xff] %vm1084, %v1033
        %1108 = vst.msk [vmem:[#allocation3 + $0xb8] sm:$0xff] %vm1084, %v1035
        %1109 = vst.msk [vmem:[#allocation3 + $0xc0] sm:$0xff] %vm1084, %v1037
        %1110 = vst.msk [vmem:[#allocation3 + $0xc8] sm:$0xff] %vm1084, %v1039
        %1111 = vst.msk [vmem:[#allocation3 + $0xd0] sm:$0xff] %vm1084, %v1041
        %1112 = vst.msk [vmem:[#allocation3 + $0xd8] sm:$0xff] %vm1084, %v1043
        %1113 = vst.msk [vmem:[#allocation3 + $0xe0] sm:$0xff] %vm1084, %v1045
        %1114 = vst.msk [vmem:[#allocation3 + $0xe8] sm:$0xff] %vm1084, %v1047
        %1115 = vst.msk [vmem:[#allocation3 + $0xf0] sm:$0xff] %vm1084, %v1049
        %1116 = vst.msk [vmem:[#allocation3 + $0xf8] sm:$0xff] %vm1084, %v1051
        %v1117 = vld [vmem:[%s248 + $0x2] sm:$0xff]
        %v1118 = vld [vmem:[%s248 + $0xa] sm:$0xff]
        %v1119 = vld [vmem:[%s248 + $0x1a] sm:$0xff]
        %v1120 = vld [vmem:[%s248 + $0x22] sm:$0xff]
        %v1121 = vld [vmem:[%s248 + $0x32] sm:$0xff]
        %v1122 = vld [vmem:[%s248 + $0x3a] sm:$0xff]
        %v1123 = vld [vmem:[%s248 + $0x4a] sm:$0xff]
        %v1124 = vld [vmem:[%s248 + $0x52] sm:$0xff]
        %v1125 = vld [vmem:[%s248 + $0x62] sm:$0xff]
        %v1126 = vld [vmem:[%s248 + $0x6a] sm:$0xff]
        %v1127 = vld [vmem:[%s248 + $0x7a] sm:$0xff]
        %v1128 = vld [vmem:[%s248 + $0x82] sm:$0xff]
        %v1129 = vld [vmem:[%s248 + $0x92] sm:$0xff]
        %v1130 = vld [vmem:[%s248 + $0x9a] sm:$0xff]
        %v1131 = vld [vmem:[%s248 + $0xaa] sm:$0xff]
        %v1132 = vld [vmem:[%s248 + $0xb2] sm:$0xff]
        %v1133 = vld [vmem:[%s248 + $0xc2] sm:$0xff]
        %v1134 = vld [vmem:[%s248 + $0xca] sm:$0xff]
        %v1135 = vld [vmem:[%s248 + $0xda] sm:$0xff]
        %v1136 = vld [vmem:[%s248 + $0xe2] sm:$0xff]
        %v1137 = vld [vmem:[%s248 + $0xf2] sm:$0xff]
        %v1138 = vld [vmem:[%s248 + $0xfa] sm:$0xff]
        %v1139 = vld [vmem:[%s248 + $0x10a] sm:$0xff]
        %v1140 = vld [vmem:[%s248 + $0x112] sm:$0xff]
        %v1141 = vld [vmem:[%s248 + $0x122] sm:$0xff]
        %v1142 = vld [vmem:[%s248 + $0x12a] sm:$0xff]
        %v1143 = vld [vmem:[%s248 + $0x13a] sm:$0xff]
        %v1144 = vld [vmem:[%s248 + $0x142] sm:$0xff]
        %v1145 = vld [vmem:[%s248 + $0x152] sm:$0xff]
        %v1146 = vld [vmem:[%s248 + $0x15a] sm:$0xff]
        %v1147 = vld [vmem:[%s248 + $0x16a] sm:$0xff]
        %v1148 = vld [vmem:[%s248 + $0x172] sm:$0xff]
        %1181 = vrot.lane.b32.xlu0 %v1117, 20
        %v1182 = vpop.permute.xlu0 %1181
        %1183 = vrot.lane.b32.xlu0 %v1118, 20
        %v1184 = vpop.permute.xlu0 %1183
        %1185 = vrot.lane.b32.xlu0 %v1119, 20
        %v1186 = vpop.permute.xlu0 %1185
        %1187 = vrot.lane.b32.xlu0 %v1120, 20
        %v1188 = vpop.permute.xlu0 %1187
        %1189 = vrot.lane.b32.xlu0 %v1121, 20
        %v1190 = vpop.permute.xlu0 %1189
        %1191 = vrot.lane.b32.xlu0 %v1122, 20
        %v1192 = vpop.permute.xlu0 %1191
        %1193 = vrot.lane.b32.xlu0 %v1123, 20
        %v1194 = vpop.permute.xlu0 %1193
        %1195 = vrot.lane.b32.xlu0 %v1124, 20
        %v1196 = vpop.permute.xlu0 %1195
        %1197 = vrot.lane.b32.xlu0 %v1125, 20
        %v1198 = vpop.permute.xlu0 %1197
        %1199 = vrot.lane.b32.xlu0 %v1126, 20
        %v1200 = vpop.permute.xlu0 %1199
        %1201 = vrot.lane.b32.xlu0 %v1127, 20
        %v1202 = vpop.permute.xlu0 %1201
        %1203 = vrot.lane.b32.xlu0 %v1128, 20
        %v1204 = vpop.permute.xlu0 %1203
        %1205 = vrot.lane.b32.xlu0 %v1129, 20
        %v1206 = vpop.permute.xlu0 %1205
        %1207 = vrot.lane.b32.xlu0 %v1130, 20
        %v1208 = vpop.permute.xlu0 %1207
        %1209 = vrot.lane.b32.xlu0 %v1131, 20
        %v1210 = vpop.permute.xlu0 %1209
        %1211 = vrot.lane.b32.xlu0 %v1132, 20
        %v1212 = vpop.permute.xlu0 %1211
        %1213 = vrot.lane.b32.xlu0 %v1133, 20
        %v1214 = vpop.permute.xlu0 %1213
        %1215 = vrot.lane.b32.xlu0 %v1134, 20
        %v1216 = vpop.permute.xlu0 %1215
        %1217 = vrot.lane.b32.xlu0 %v1135, 20
        %v1218 = vpop.permute.xlu0 %1217
        %1219 = vrot.lane.b32.xlu0 %v1136, 20
        %v1220 = vpop.permute.xlu0 %1219
        %1221 = vrot.lane.b32.xlu0 %v1137, 20
        %v1222 = vpop.permute.xlu0 %1221
        %1223 = vrot.lane.b32.xlu0 %v1138, 20
        %v1224 = vpop.permute.xlu0 %1223
        %1225 = vrot.lane.b32.xlu0 %v1139, 20
        %v1226 = vpop.permute.xlu0 %1225
        %1227 = vrot.lane.b32.xlu0 %v1140, 20
        %v1228 = vpop.permute.xlu0 %1227
        %1229 = vrot.lane.b32.xlu0 %v1141, 20
        %v1230 = vpop.permute.xlu0 %1229
        %1231 = vrot.lane.b32.xlu0 %v1142, 20
        %v1232 = vpop.permute.xlu0 %1231
        %1233 = vrot.lane.b32.xlu0 %v1143, 20
        %v1234 = vpop.permute.xlu0 %1233
        %1235 = vrot.lane.b32.xlu0 %v1144, 20
        %v1236 = vpop.permute.xlu0 %1235
        %1237 = vrot.lane.b32.xlu0 %v1145, 20
        %v1238 = vpop.permute.xlu0 %1237
        %1239 = vrot.lane.b32.xlu0 %v1146, 20
        %v1240 = vpop.permute.xlu0 %1239
        %1241 = vrot.lane.b32.xlu0 %v1147, 20
        %v1242 = vpop.permute.xlu0 %1241
        %1243 = vrot.lane.b32.xlu0 %v1148, 20
        %v1244 = vpop.permute.xlu0 %1243
        %vm1277 = vcmask 195744
        %1278 = vst.msk [vmem:[#allocation3] sm:$0xff] %vm1277, %v1182
        %1279 = vst.msk [vmem:[#allocation3 + $0x8] sm:$0xff] %vm1277, %v1184
        %1280 = vst.msk [vmem:[#allocation3 + $0x10] sm:$0xff] %vm1277, %v1186
        %1281 = vst.msk [vmem:[#allocation3 + $0x18] sm:$0xff] %vm1277, %v1188
        %1282 = vst.msk [vmem:[#allocation3 + $0x20] sm:$0xff] %vm1277, %v1190
        %1283 = vst.msk [vmem:[#allocation3 + $0x28] sm:$0xff] %vm1277, %v1192
        %1284 = vst.msk [vmem:[#allocation3 + $0x30] sm:$0xff] %vm1277, %v1194
        %1285 = vst.msk [vmem:[#allocation3 + $0x38] sm:$0xff] %vm1277, %v1196
        %1286 = vst.msk [vmem:[#allocation3 + $0x40] sm:$0xff] %vm1277, %v1198
        %1287 = vst.msk [vmem:[#allocation3 + $0x48] sm:$0xff] %vm1277, %v1200
        %1288 = vst.msk [vmem:[#allocation3 + $0x50] sm:$0xff] %vm1277, %v1202
        %1289 = vst.msk [vmem:[#allocation3 + $0x58] sm:$0xff] %vm1277, %v1204
        %1290 = vst.msk [vmem:[#allocation3 + $0x60] sm:$0xff] %vm1277, %v1206
        %1291 = vst.msk [vmem:[#allocation3 + $0x68] sm:$0xff] %vm1277, %v1208
        %1292 = vst.msk [vmem:[#allocation3 + $0x70] sm:$0xff] %vm1277, %v1210
        %1293 = vst.msk [vmem:[#allocation3 + $0x78] sm:$0xff] %vm1277, %v1212
        %1294 = vst.msk [vmem:[#allocation3 + $0x80] sm:$0xff] %vm1277, %v1214
        %1295 = vst.msk [vmem:[#allocation3 + $0x88] sm:$0xff] %vm1277, %v1216
        %1296 = vst.msk [vmem:[#allocation3 + $0x90] sm:$0xff] %vm1277, %v1218
        %1297 = vst.msk [vmem:[#allocation3 + $0x98] sm:$0xff] %vm1277, %v1220
        %1298 = vst.msk [vmem:[#allocation3 + $0xa0] sm:$0xff] %vm1277, %v1222
        %1299 = vst.msk [vmem:[#allocation3 + $0xa8] sm:$0xff] %vm1277, %v1224
        %1300 = vst.msk [vmem:[#allocation3 + $0xb0] sm:$0xff] %vm1277, %v1226
        %1301 = vst.msk [vmem:[#allocation3 + $0xb8] sm:$0xff] %vm1277, %v1228
        %1302 = vst.msk [vmem:[#allocation3 + $0xc0] sm:$0xff] %vm1277, %v1230
        %1303 = vst.msk [vmem:[#allocation3 + $0xc8] sm:$0xff] %vm1277, %v1232
        %1304 = vst.msk [vmem:[#allocation3 + $0xd0] sm:$0xff] %vm1277, %v1234
        %1305 = vst.msk [vmem:[#allocation3 + $0xd8] sm:$0xff] %vm1277, %v1236
        %1306 = vst.msk [vmem:[#allocation3 + $0xe0] sm:$0xff] %vm1277, %v1238
        %1307 = vst.msk [vmem:[#allocation3 + $0xe8] sm:$0xff] %vm1277, %v1240
        %1308 = vst.msk [vmem:[#allocation3 + $0xf0] sm:$0xff] %vm1277, %v1242
        %1309 = vst.msk [vmem:[#allocation3 + $0xf8] sm:$0xff] %vm1277, %v1244
        %s1310 = scalar_lea.vmem [#allocation2], 48
        %v1311 = vld [vmem:[%s1310] sm:$0xff]
        %v1312 = vld [vmem:[%s1310 + $0x8] sm:$0xff]
        %v1313 = vld [vmem:[%s1310 + $0x18] sm:$0xff]
        %v1314 = vld [vmem:[%s1310 + $0x20] sm:$0xff]
        %v1315 = vld [vmem:[%s1310 + $0x30] sm:$0xff]
        %v1316 = vld [vmem:[%s1310 + $0x38] sm:$0xff]
        %v1317 = vld [vmem:[%s1310 + $0x48] sm:$0xff]
        %v1318 = vld [vmem:[%s1310 + $0x50] sm:$0xff]
        %v1319 = vld [vmem:[%s1310 + $0x60] sm:$0xff]
        %v1320 = vld [vmem:[%s1310 + $0x68] sm:$0xff]
        %v1321 = vld [vmem:[%s1310 + $0x78] sm:$0xff]
        %v1322 = vld [vmem:[%s1310 + $0x80] sm:$0xff]
        %v1323 = vld [vmem:[%s1310 + $0x90] sm:$0xff]
        %v1324 = vld [vmem:[%s1310 + $0x98] sm:$0xff]
        %v1325 = vld [vmem:[%s1310 + $0xa8] sm:$0xff]
        %v1326 = vld [vmem:[%s1310 + $0xb0] sm:$0xff]
        %v1327 = vld [vmem:[%s1310 + $0xc0] sm:$0xff]
        %v1328 = vld [vmem:[%s1310 + $0xc8] sm:$0xff]
        %v1329 = vld [vmem:[%s1310 + $0xd8] sm:$0xff]
        %v1330 = vld [vmem:[%s1310 + $0xe0] sm:$0xff]
        %v1331 = vld [vmem:[%s1310 + $0xf0] sm:$0xff]
        %v1332 = vld [vmem:[%s1310 + $0xf8] sm:$0xff]
        %v1333 = vld [vmem:[%s1310 + $0x108] sm:$0xff]
        %v1334 = vld [vmem:[%s1310 + $0x110] sm:$0xff]
        %v1335 = vld [vmem:[%s1310 + $0x120] sm:$0xff]
        %v1336 = vld [vmem:[%s1310 + $0x128] sm:$0xff]
        %v1337 = vld [vmem:[%s1310 + $0x138] sm:$0xff]
        %v1338 = vld [vmem:[%s1310 + $0x140] sm:$0xff]
        %v1339 = vld [vmem:[%s1310 + $0x150] sm:$0xff]
        %v1340 = vld [vmem:[%s1310 + $0x158] sm:$0xff]
        %v1341 = vld [vmem:[%s1310 + $0x168] sm:$0xff]
        %v1342 = vld [vmem:[%s1310 + $0x170] sm:$0xff]
        %1375 = vrot.lane.b32.xlu0 %v1311, 24
        %v1376 = vpop.permute.xlu0 %1375
        %1377 = vrot.lane.b32.xlu0 %v1312, 24
        %v1378 = vpop.permute.xlu0 %1377
        %1379 = vrot.lane.b32.xlu0 %v1313, 24
        %v1380 = vpop.permute.xlu0 %1379
        %1381 = vrot.lane.b32.xlu0 %v1314, 24
        %v1382 = vpop.permute.xlu0 %1381
        %1383 = vrot.lane.b32.xlu0 %v1315, 24
        %v1384 = vpop.permute.xlu0 %1383
        %1385 = vrot.lane.b32.xlu0 %v1316, 24
        %v1386 = vpop.permute.xlu0 %1385
        %1387 = vrot.lane.b32.xlu0 %v1317, 24
        %v1388 = vpop.permute.xlu0 %1387
        %1389 = vrot.lane.b32.xlu0 %v1318, 24
        %v1390 = vpop.permute.xlu0 %1389
        %1391 = vrot.lane.b32.xlu0 %v1319, 24
        %v1392 = vpop.permute.xlu0 %1391
        %1393 = vrot.lane.b32.xlu0 %v1320, 24
        %v1394 = vpop.permute.xlu0 %1393
        %1395 = vrot.lane.b32.xlu0 %v1321, 24
        %v1396 = vpop.permute.xlu0 %1395
        %1397 = vrot.lane.b32.xlu0 %v1322, 24
        %v1398 = vpop.permute.xlu0 %1397
        %1399 = vrot.lane.b32.xlu0 %v1323, 24
        %v1400 = vpop.permute.xlu0 %1399
        %1401 = vrot.lane.b32.xlu0 %v1324, 24
        %v1402 = vpop.permute.xlu0 %1401
        %1403 = vrot.lane.b32.xlu0 %v1325, 24
        %v1404 = vpop.permute.xlu0 %1403
        %1405 = vrot.lane.b32.xlu0 %v1326, 24
        %v1406 = vpop.permute.xlu0 %1405
        %1407 = vrot.lane.b32.xlu0 %v1327, 24
        %v1408 = vpop.permute.xlu0 %1407
        %1409 = vrot.lane.b32.xlu0 %v1328, 24
        %v1410 = vpop.permute.xlu0 %1409
        %1411 = vrot.lane.b32.xlu0 %v1329, 24
        %v1412 = vpop.permute.xlu0 %1411
        %1413 = vrot.lane.b32.xlu0 %v1330, 24
        %v1414 = vpop.permute.xlu0 %1413
        %1415 = vrot.lane.b32.xlu0 %v1331, 24
        %v1416 = vpop.permute.xlu0 %1415
        %1417 = vrot.lane.b32.xlu0 %v1332, 24
        %v1418 = vpop.permute.xlu0 %1417
        %1419 = vrot.lane.b32.xlu0 %v1333, 24
        %v1420 = vpop.permute.xlu0 %1419
        %1421 = vrot.lane.b32.xlu0 %v1334, 24
        %v1422 = vpop.permute.xlu0 %1421
        %1423 = vrot.lane.b32.xlu0 %v1335, 24
        %v1424 = vpop.permute.xlu0 %1423
        %1425 = vrot.lane.b32.xlu0 %v1336, 24
        %v1426 = vpop.permute.xlu0 %1425
        %1427 = vrot.lane.b32.xlu0 %v1337, 24
        %v1428 = vpop.permute.xlu0 %1427
        %1429 = vrot.lane.b32.xlu0 %v1338, 24
        %v1430 = vpop.permute.xlu0 %1429
        %1431 = vrot.lane.b32.xlu0 %v1339, 24
        %v1432 = vpop.permute.xlu0 %1431
        %1433 = vrot.lane.b32.xlu0 %v1340, 24
        %v1434 = vpop.permute.xlu0 %1433
        %1435 = vrot.lane.b32.xlu0 %v1341, 24
        %v1436 = vpop.permute.xlu0 %1435
        %1437 = vrot.lane.b32.xlu0 %v1342, 24
        %v1438 = vpop.permute.xlu0 %1437
        %vm1471 = vcmask 228544
        %1472 = vst.msk [vmem:[#allocation3] sm:$0xff] %vm1471, %v1376
        %1473 = vst.msk [vmem:[#allocation3 + $0x8] sm:$0xff] %vm1471, %v1378
        %1474 = vst.msk [vmem:[#allocation3 + $0x10] sm:$0xff] %vm1471, %v1380
        %1475 = vst.msk [vmem:[#allocation3 + $0x18] sm:$0xff] %vm1471, %v1382
        %1476 = vst.msk [vmem:[#allocation3 + $0x20] sm:$0xff] %vm1471, %v1384
        %1477 = vst.msk [vmem:[#allocation3 + $0x28] sm:$0xff] %vm1471, %v1386
        %1478 = vst.msk [vmem:[#allocation3 + $0x30] sm:$0xff] %vm1471, %v1388
        %1479 = vst.msk [vmem:[#allocation3 + $0x38] sm:$0xff] %vm1471, %v1390
        %1480 = vst.msk [vmem:[#allocation3 + $0x40] sm:$0xff] %vm1471, %v1392
        %1481 = vst.msk [vmem:[#allocation3 + $0x48] sm:$0xff] %vm1471, %v1394
        %1482 = vst.msk [vmem:[#allocation3 + $0x50] sm:$0xff] %vm1471, %v1396
        %1483 = vst.msk [vmem:[#allocation3 + $0x58] sm:$0xff] %vm1471, %v1398
        %1484 = vst.msk [vmem:[#allocation3 + $0x60] sm:$0xff] %vm1471, %v1400
        %1485 = vst.msk [vmem:[#allocation3 + $0x68] sm:$0xff] %vm1471, %v1402
        %1486 = vst.msk [vmem:[#allocation3 + $0x70] sm:$0xff] %vm1471, %v1404
        %1487 = vst.msk [vmem:[#allocation3 + $0x78] sm:$0xff] %vm1471, %v1406
        %1488 = vst.msk [vmem:[#allocation3 + $0x80] sm:$0xff] %vm1471, %v1408
        %1489 = vst.msk [vmem:[#allocation3 + $0x88] sm:$0xff] %vm1471, %v1410
        %1490 = vst.msk [vmem:[#allocation3 + $0x90] sm:$0xff] %vm1471, %v1412
        %1491 = vst.msk [vmem:[#allocation3 + $0x98] sm:$0xff] %vm1471, %v1414
        %1492 = vst.msk [vmem:[#allocation3 + $0xa0] sm:$0xff] %vm1471, %v1416
        %1493 = vst.msk [vmem:[#allocation3 + $0xa8] sm:$0xff] %vm1471, %v1418
        %1494 = vst.msk [vmem:[#allocation3 + $0xb0] sm:$0xff] %vm1471, %v1420
        %1495 = vst.msk [vmem:[#allocation3 + $0xb8] sm:$0xff] %vm1471, %v1422
        %1496 = vst.msk [vmem:[#allocation3 + $0xc0] sm:$0xff] %vm1471, %v1424
        %1497 = vst.msk [vmem:[#allocation3 + $0xc8] sm:$0xff] %vm1471, %v1426
        %1498 = vst.msk [vmem:[#allocation3 + $0xd0] sm:$0xff] %vm1471, %v1428
        %1499 = vst.msk [vmem:[#allocation3 + $0xd8] sm:$0xff] %vm1471, %v1430
        %1500 = vst.msk [vmem:[#allocation3 + $0xe0] sm:$0xff] %vm1471, %v1432
        %1501 = vst.msk [vmem:[#allocation3 + $0xe8] sm:$0xff] %vm1471, %v1434
        %1502 = vst.msk [vmem:[#allocation3 + $0xf0] sm:$0xff] %vm1471, %v1436
        %1503 = vst.msk [vmem:[#allocation3 + $0xf8] sm:$0xff] %vm1471, %v1438
        %v1504 = vld [vmem:[%s1310 + $0x1] sm:$0xff]
        %v1505 = vld [vmem:[%s1310 + $0x9] sm:$0xff]
        %v1506 = vld [vmem:[%s1310 + $0x19] sm:$0xff]
        %v1507 = vld [vmem:[%s1310 + $0x21] sm:$0xff]
        %v1508 = vld [vmem:[%s1310 + $0x31] sm:$0xff]
        %v1509 = vld [vmem:[%s1310 + $0x39] sm:$0xff]
        %v1510 = vld [vmem:[%s1310 + $0x49] sm:$0xff]
        %v1511 = vld [vmem:[%s1310 + $0x51] sm:$0xff]
        %v1512 = vld [vmem:[%s1310 + $0x61] sm:$0xff]
        %v1513 = vld [vmem:[%s1310 + $0x69] sm:$0xff]
        %v1514 = vld [vmem:[%s1310 + $0x79] sm:$0xff]
        %v1515 = vld [vmem:[%s1310 + $0x81] sm:$0xff]
        %v1516 = vld [vmem:[%s1310 + $0x91] sm:$0xff]
        %v1517 = vld [vmem:[%s1310 + $0x99] sm:$0xff]
        %v1518 = vld [vmem:[%s1310 + $0xa9] sm:$0xff]
        %v1519 = vld [vmem:[%s1310 + $0xb1] sm:$0xff]
        %v1520 = vld [vmem:[%s1310 + $0xc1] sm:$0xff]
        %v1521 = vld [vmem:[%s1310 + $0xc9] sm:$0xff]
        %v1522 = vld [vmem:[%s1310 + $0xd9] sm:$0xff]
        %v1523 = vld [vmem:[%s1310 + $0xe1] sm:$0xff]
        %v1524 = vld [vmem:[%s1310 + $0xf1] sm:$0xff]
        %v1525 = vld [vmem:[%s1310 + $0xf9] sm:$0xff]
        %v1526 = vld [vmem:[%s1310 + $0x109] sm:$0xff]
        %v1527 = vld [vmem:[%s1310 + $0x111] sm:$0xff]
        %v1528 = vld [vmem:[%s1310 + $0x121] sm:$0xff]
        %v1529 = vld [vmem:[%s1310 + $0x129] sm:$0xff]
        %v1530 = vld [vmem:[%s1310 + $0x139] sm:$0xff]
        %v1531 = vld [vmem:[%s1310 + $0x141] sm:$0xff]
        %v1532 = vld [vmem:[%s1310 + $0x151] sm:$0xff]
        %v1533 = vld [vmem:[%s1310 + $0x159] sm:$0xff]
        %v1534 = vld [vmem:[%s1310 + $0x169] sm:$0xff]
        %v1535 = vld [vmem:[%s1310 + $0x171] sm:$0xff]
        %1568 = vrot.lane.b32.xlu0 %v1504, 28
        %v1569 = vpop.permute.xlu0 %1568
        %1570 = vrot.lane.b32.xlu0 %v1505, 28
        %v1571 = vpop.permute.xlu0 %1570
        %1572 = vrot.lane.b32.xlu0 %v1506, 28
        %v1573 = vpop.permute.xlu0 %1572
        %1574 = vrot.lane.b32.xlu0 %v1507, 28
        %v1575 = vpop.permute.xlu0 %1574
        %1576 = vrot.lane.b32.xlu0 %v1508, 28
        %v1577 = vpop.permute.xlu0 %1576
        %1578 = vrot.lane.b32.xlu0 %v1509, 28
        %v1579 = vpop.permute.xlu0 %1578
        %1580 = vrot.lane.b32.xlu0 %v1510, 28
        %v1581 = vpop.permute.xlu0 %1580
        %1582 = vrot.lane.b32.xlu0 %v1511, 28
        %v1583 = vpop.permute.xlu0 %1582
        %1584 = vrot.lane.b32.xlu0 %v1512, 28
        %v1585 = vpop.permute.xlu0 %1584
        %1586 = vrot.lane.b32.xlu0 %v1513, 28
        %v1587 = vpop.permute.xlu0 %1586
        %1588 = vrot.lane.b32.xlu0 %v1514, 28
        %v1589 = vpop.permute.xlu0 %1588
        %1590 = vrot.lane.b32.xlu0 %v1515, 28
        %v1591 = vpop.permute.xlu0 %1590
        %1592 = vrot.lane.b32.xlu0 %v1516, 28
        %v1593 = vpop.permute.xlu0 %1592
        %1594 = vrot.lane.b32.xlu0 %v1517, 28
        %v1595 = vpop.permute.xlu0 %1594
        %1596 = vrot.lane.b32.xlu0 %v1518, 28
        %v1597 = vpop.permute.xlu0 %1596
        %1598 = vrot.lane.b32.xlu0 %v1519, 28
        %v1599 = vpop.permute.xlu0 %1598
        %1600 = vrot.lane.b32.xlu0 %v1520, 28
        %v1601 = vpop.permute.xlu0 %1600
        %1602 = vrot.lane.b32.xlu0 %v1521, 28
        %v1603 = vpop.permute.xlu0 %1602
        %1604 = vrot.lane.b32.xlu0 %v1522, 28
        %v1605 = vpop.permute.xlu0 %1604
        %1606 = vrot.lane.b32.xlu0 %v1523, 28
        %v1607 = vpop.permute.xlu0 %1606
        %1608 = vrot.lane.b32.xlu0 %v1524, 28
        %v1609 = vpop.permute.xlu0 %1608
        %1610 = vrot.lane.b32.xlu0 %v1525, 28
        %v1611 = vpop.permute.xlu0 %1610
        %1612 = vrot.lane.b32.xlu0 %v1526, 28
        %v1613 = vpop.permute.xlu0 %1612
        %1614 = vrot.lane.b32.xlu0 %v1527, 28
        %v1615 = vpop.permute.xlu0 %1614
        %1616 = vrot.lane.b32.xlu0 %v1528, 28
        %v1617 = vpop.permute.xlu0 %1616
        %1618 = vrot.lane.b32.xlu0 %v1529, 28
        %v1619 = vpop.permute.xlu0 %1618
        %1620 = vrot.lane.b32.xlu0 %v1530, 28
        %v1621 = vpop.permute.xlu0 %1620
        %1622 = vrot.lane.b32.xlu0 %v1531, 28
        %v1623 = vpop.permute.xlu0 %1622
        %1624 = vrot.lane.b32.xlu0 %v1532, 28
        %v1625 = vpop.permute.xlu0 %1624
        %1626 = vrot.lane.b32.xlu0 %v1533, 28
        %v1627 = vpop.permute.xlu0 %1626
        %1628 = vrot.lane.b32.xlu0 %v1534, 28
        %v1629 = vpop.permute.xlu0 %1628
        %1630 = vrot.lane.b32.xlu0 %v1535, 28
        %v1631 = vpop.permute.xlu0 %1630
        %vm1664 = vcmask 261344
        %1665 = vst.msk [vmem:[#allocation3] sm:$0xff] %vm1664, %v1569
        %1666 = vst.msk [vmem:[#allocation3 + $0x8] sm:$0xff] %vm1664, %v1571
        %1667 = vst.msk [vmem:[#allocation3 + $0x10] sm:$0xff] %vm1664, %v1573
        %1668 = vst.msk [vmem:[#allocation3 + $0x18] sm:$0xff] %vm1664, %v1575
        %1669 = vst.msk [vmem:[#allocation3 + $0x20] sm:$0xff] %vm1664, %v1577
        %1670 = vst.msk [vmem:[#allocation3 + $0x28] sm:$0xff] %vm1664, %v1579
        %1671 = vst.msk [vmem:[#allocation3 + $0x30] sm:$0xff] %vm1664, %v1581
        %1672 = vst.msk [vmem:[#allocation3 + $0x38] sm:$0xff] %vm1664, %v1583
        %1673 = vst.msk [vmem:[#allocation3 + $0x40] sm:$0xff] %vm1664, %v1585
        %1674 = vst.msk [vmem:[#allocation3 + $0x48] sm:$0xff] %vm1664, %v1587
        %1675 = vst.msk [vmem:[#allocation3 + $0x50] sm:$0xff] %vm1664, %v1589
        %1676 = vst.msk [vmem:[#allocation3 + $0x58] sm:$0xff] %vm1664, %v1591
        %1677 = vst.msk [vmem:[#allocation3 + $0x60] sm:$0xff] %vm1664, %v1593
        %1678 = vst.msk [vmem:[#allocation3 + $0x68] sm:$0xff] %vm1664, %v1595
        %1679 = vst.msk [vmem:[#allocation3 + $0x70] sm:$0xff] %vm1664, %v1597
        %1680 = vst.msk [vmem:[#allocation3 + $0x78] sm:$0xff] %vm1664, %v1599
        %1681 = vst.msk [vmem:[#allocation3 + $0x80] sm:$0xff] %vm1664, %v1601
        %1682 = vst.msk [vmem:[#allocation3 + $0x88] sm:$0xff] %vm1664, %v1603
        %1683 = vst.msk [vmem:[#allocation3 + $0x90] sm:$0xff] %vm1664, %v1605
        %1684 = vst.msk [vmem:[#allocation3 + $0x98] sm:$0xff] %vm1664, %v1607
        %1685 = vst.msk [vmem:[#allocation3 + $0xa0] sm:$0xff] %vm1664, %v1609
        %1686 = vst.msk [vmem:[#allocation3 + $0xa8] sm:$0xff] %vm1664, %v1611
        %1687 = vst.msk [vmem:[#allocation3 + $0xb0] sm:$0xff] %vm1664, %v1613
        %1688 = vst.msk [vmem:[#allocation3 + $0xb8] sm:$0xff] %vm1664, %v1615
        %1689 = vst.msk [vmem:[#allocation3 + $0xc0] sm:$0xff] %vm1664, %v1617
        %1690 = vst.msk [vmem:[#allocation3 + $0xc8] sm:$0xff] %vm1664, %v1619
        %1691 = vst.msk [vmem:[#allocation3 + $0xd0] sm:$0xff] %vm1664, %v1621
        %1692 = vst.msk [vmem:[#allocation3 + $0xd8] sm:$0xff] %vm1664, %v1623
        %1693 = vst.msk [vmem:[#allocation3 + $0xe0] sm:$0xff] %vm1664, %v1625
        %1694 = vst.msk [vmem:[#allocation3 + $0xe8] sm:$0xff] %vm1664, %v1627
        %1695 = vst.msk [vmem:[#allocation3 + $0xf0] sm:$0xff] %vm1664, %v1629
        %1696 = vst.msk [vmem:[#allocation3 + $0xf8] sm:$0xff] %vm1664, %v1631
        %v1697 = vld [vmem:[%s1310 + $0x2] sm:$0xff]
        %v1698 = vld [vmem:[%s1310 + $0xa] sm:$0xff]
        %v1699 = vld [vmem:[%s1310 + $0x1a] sm:$0xff]
        %v1700 = vld [vmem:[%s1310 + $0x22] sm:$0xff]
        %v1701 = vld [vmem:[%s1310 + $0x32] sm:$0xff]
        %v1702 = vld [vmem:[%s1310 + $0x3a] sm:$0xff]
        %v1703 = vld [vmem:[%s1310 + $0x4a] sm:$0xff]
        %v1704 = vld [vmem:[%s1310 + $0x52] sm:$0xff]
        %v1705 = vld [vmem:[%s1310 + $0x62] sm:$0xff]
        %v1706 = vld [vmem:[%s1310 + $0x6a] sm:$0xff]
        %v1707 = vld [vmem:[%s1310 + $0x7a] sm:$0xff]
        %v1708 = vld [vmem:[%s1310 + $0x82] sm:$0xff]
        %v1709 = vld [vmem:[%s1310 + $0x92] sm:$0xff]
        %v1710 = vld [vmem:[%s1310 + $0x9a] sm:$0xff]
        %v1711 = vld [vmem:[%s1310 + $0xaa] sm:$0xff]
        %v1712 = vld [vmem:[%s1310 + $0xb2] sm:$0xff]
        %v1713 = vld [vmem:[%s1310 + $0xc2] sm:$0xff]
        %v1714 = vld [vmem:[%s1310 + $0xca] sm:$0xff]
        %v1715 = vld [vmem:[%s1310 + $0xda] sm:$0xff]
        %v1716 = vld [vmem:[%s1310 + $0xe2] sm:$0xff]
        %v1717 = vld [vmem:[%s1310 + $0xf2] sm:$0xff]
        %v1718 = vld [vmem:[%s1310 + $0xfa] sm:$0xff]
        %v1719 = vld [vmem:[%s1310 + $0x10a] sm:$0xff]
        %v1720 = vld [vmem:[%s1310 + $0x112] sm:$0xff]
        %v1721 = vld [vmem:[%s1310 + $0x122] sm:$0xff]
        %v1722 = vld [vmem:[%s1310 + $0x12a] sm:$0xff]
        %v1723 = vld [vmem:[%s1310 + $0x13a] sm:$0xff]
        %v1724 = vld [vmem:[%s1310 + $0x142] sm:$0xff]
        %v1725 = vld [vmem:[%s1310 + $0x152] sm:$0xff]
        %v1726 = vld [vmem:[%s1310 + $0x15a] sm:$0xff]
        %v1727 = vld [vmem:[%s1310 + $0x16a] sm:$0xff]
        %v1728 = vld [vmem:[%s1310 + $0x172] sm:$0xff]
        %1761 = vrot.lane.b32.xlu0 %v1697, 32
        %v1762 = vpop.permute.xlu0 %1761
        %1763 = vrot.lane.b32.xlu0 %v1698, 32
        %v1764 = vpop.permute.xlu0 %1763
        %1765 = vrot.lane.b32.xlu0 %v1699, 32
        %v1766 = vpop.permute.xlu0 %1765
        %1767 = vrot.lane.b32.xlu0 %v1700, 32
        %v1768 = vpop.permute.xlu0 %1767
        %1769 = vrot.lane.b32.xlu0 %v1701, 32
        %v1770 = vpop.permute.xlu0 %1769
        %1771 = vrot.lane.b32.xlu0 %v1702, 32
        %v1772 = vpop.permute.xlu0 %1771
        %1773 = vrot.lane.b32.xlu0 %v1703, 32
        %v1774 = vpop.permute.xlu0 %1773
        %1775 = vrot.lane.b32.xlu0 %v1704, 32
        %v1776 = vpop.permute.xlu0 %1775
        %1777 = vrot.lane.b32.xlu0 %v1705, 32
        %v1778 = vpop.permute.xlu0 %1777
        %1779 = vrot.lane.b32.xlu0 %v1706, 32
        %v1780 = vpop.permute.xlu0 %1779
        %1781 = vrot.lane.b32.xlu0 %v1707, 32
        %v1782 = vpop.permute.xlu0 %1781
        %1783 = vrot.lane.b32.xlu0 %v1708, 32
        %v1784 = vpop.permute.xlu0 %1783
        %1785 = vrot.lane.b32.xlu0 %v1709, 32
        %v1786 = vpop.permute.xlu0 %1785
        %1787 = vrot.lane.b32.xlu0 %v1710, 32
        %v1788 = vpop.permute.xlu0 %1787
        %1789 = vrot.lane.b32.xlu0 %v1711, 32
        %v1790 = vpop.permute.xlu0 %1789
        %1791 = vrot.lane.b32.xlu0 %v1712, 32
        %v1792 = vpop.permute.xlu0 %1791
        %1793 = vrot.lane.b32.xlu0 %v1713, 32
        %v1794 = vpop.permute.xlu0 %1793
        %1795 = vrot.lane.b32.xlu0 %v1714, 32
        %v1796 = vpop.permute.xlu0 %1795
        %1797 = vrot.lane.b32.xlu0 %v1715, 32
        %v1798 = vpop.permute.xlu0 %1797
        %1799 = vrot.lane.b32.xlu0 %v1716, 32
        %v1800 = vpop.permute.xlu0 %1799
        %1801 = vrot.lane.b32.xlu0 %v1717, 32
        %v1802 = vpop.permute.xlu0 %1801
        %1803 = vrot.lane.b32.xlu0 %v1718, 32
        %v1804 = vpop.permute.xlu0 %1803
        %1805 = vrot.lane.b32.xlu0 %v1719, 32
        %v1806 = vpop.permute.xlu0 %1805
        %1807 = vrot.lane.b32.xlu0 %v1720, 32
        %v1808 = vpop.permute.xlu0 %1807
        %1809 = vrot.lane.b32.xlu0 %v1721, 32
        %v1810 = vpop.permute.xlu0 %1809
        %1811 = vrot.lane.b32.xlu0 %v1722, 32
        %v1812 = vpop.permute.xlu0 %1811
        %1813 = vrot.lane.b32.xlu0 %v1723, 32
        %v1814 = vpop.permute.xlu0 %1813
        %1815 = vrot.lane.b32.xlu0 %v1724, 32
        %v1816 = vpop.permute.xlu0 %1815
        %1817 = vrot.lane.b32.xlu0 %v1725, 32
        %v1818 = vpop.permute.xlu0 %1817
        %1819 = vrot.lane.b32.xlu0 %v1726, 32
        %v1820 = vpop.permute.xlu0 %1819
        %1821 = vrot.lane.b32.xlu0 %v1727, 32
        %v1822 = vpop.permute.xlu0 %1821
        %1823 = vrot.lane.b32.xlu0 %v1728, 32
        %v1824 = vpop.permute.xlu0 %1823
        %vm1857 = vcmask 294144
        %1858 = vst.msk [vmem:[#allocation3] sm:$0xff] %vm1857, %v1762
        %1859 = vst.msk [vmem:[#allocation3 + $0x8] sm:$0xff] %vm1857, %v1764
        %1860 = vst.msk [vmem:[#allocation3 + $0x10] sm:$0xff] %vm1857, %v1766
        %1861 = vst.msk [vmem:[#allocation3 + $0x18] sm:$0xff] %vm1857, %v1768
        %1862 = vst.msk [vmem:[#allocation3 + $0x20] sm:$0xff] %vm1857, %v1770
        %1863 = vst.msk [vmem:[#allocation3 + $0x28] sm:$0xff] %vm1857, %v1772
        %1864 = vst.msk [vmem:[#allocation3 + $0x30] sm:$0xff] %vm1857, %v1774
        %1865 = vst.msk [vmem:[#allocation3 + $0x38] sm:$0xff] %vm1857, %v1776
        %1866 = vst.msk [vmem:[#allocation3 + $0x40] sm:$0xff] %vm1857, %v1778
        %1867 = vst.msk [vmem:[#allocation3 + $0x48] sm:$0xff] %vm1857, %v1780
        %1868 = vst.msk [vmem:[#allocation3 + $0x50] sm:$0xff] %vm1857, %v1782
        %1869 = vst.msk [vmem:[#allocation3 + $0x58] sm:$0xff] %vm1857, %v1784
        %1870 = vst.msk [vmem:[#allocation3 + $0x60] sm:$0xff] %vm1857, %v1786
        %1871 = vst.msk [vmem:[#allocation3 + $0x68] sm:$0xff] %vm1857, %v1788
        %1872 = vst.msk [vmem:[#allocation3 + $0x70] sm:$0xff] %vm1857, %v1790
        %1873 = vst.msk [vmem:[#allocation3 + $0x78] sm:$0xff] %vm1857, %v1792
        %1874 = vst.msk [vmem:[#allocation3 + $0x80] sm:$0xff] %vm1857, %v1794
        %1875 = vst.msk [vmem:[#allocation3 + $0x88] sm:$0xff] %vm1857, %v1796
        %1876 = vst.msk [vmem:[#allocation3 + $0x90] sm:$0xff] %vm1857, %v1798
        %1877 = vst.msk [vmem:[#allocation3 + $0x98] sm:$0xff] %vm1857, %v1800
        %1878 = vst.msk [vmem:[#allocation3 + $0xa0] sm:$0xff] %vm1857, %v1802
        %1879 = vst.msk [vmem:[#allocation3 + $0xa8] sm:$0xff] %vm1857, %v1804
        %1880 = vst.msk [vmem:[#allocation3 + $0xb0] sm:$0xff] %vm1857, %v1806
        %1881 = vst.msk [vmem:[#allocation3 + $0xb8] sm:$0xff] %vm1857, %v1808
        %1882 = vst.msk [vmem:[#allocation3 + $0xc0] sm:$0xff] %vm1857, %v1810
        %1883 = vst.msk [vmem:[#allocation3 + $0xc8] sm:$0xff] %vm1857, %v1812
        %1884 = vst.msk [vmem:[#allocation3 + $0xd0] sm:$0xff] %vm1857, %v1814
        %1885 = vst.msk [vmem:[#allocation3 + $0xd8] sm:$0xff] %vm1857, %v1816
        %1886 = vst.msk [vmem:[#allocation3 + $0xe0] sm:$0xff] %vm1857, %v1818
        %1887 = vst.msk [vmem:[#allocation3 + $0xe8] sm:$0xff] %vm1857, %v1820
        %1888 = vst.msk [vmem:[#allocation3 + $0xf0] sm:$0xff] %vm1857, %v1822
        %1889 = vst.msk [vmem:[#allocation3 + $0xf8] sm:$0xff] %vm1857, %v1824
        %v1890 = vld [vmem:[#allocation3] sm:$0xff]
        %v1891 = vld [vmem:[#allocation3 + $0x8] sm:$0xff]
        %v1892 = vld [vmem:[#allocation3 + $0x10] sm:$0xff]
        %v1893 = vld [vmem:[#allocation3 + $0x18] sm:$0xff]
        %v1894 = vld [vmem:[#allocation3 + $0x20] sm:$0xff]
        %v1895 = vld [vmem:[#allocation3 + $0x28] sm:$0xff]
        %v1896 = vld [vmem:[#allocation3 + $0x30] sm:$0xff]
        %v1897 = vld [vmem:[#allocation3 + $0x38] sm:$0xff]
        %v1898 = vld [vmem:[#allocation3 + $0x40] sm:$0xff]
        %v1899 = vld [vmem:[#allocation3 + $0x48] sm:$0xff]
        %v1900 = vld [vmem:[#allocation3 + $0x50] sm:$0xff]
        %v1901 = vld [vmem:[#allocation3 + $0x58] sm:$0xff]
        %v1902 = vld [vmem:[#allocation3 + $0x60] sm:$0xff]
        %v1903 = vld [vmem:[#allocation3 + $0x68] sm:$0xff]
        %v1904 = vld [vmem:[#allocation3 + $0x70] sm:$0xff]
        %v1905 = vld [vmem:[#allocation3 + $0x78] sm:$0xff]
        %v1906 = vld [vmem:[#allocation3 + $0x80] sm:$0xff]
        %v1907 = vld [vmem:[#allocation3 + $0x88] sm:$0xff]
        %v1908 = vld [vmem:[#allocation3 + $0x90] sm:$0xff]
        %v1909 = vld [vmem:[#allocation3 + $0x98] sm:$0xff]
        %v1910 = vld [vmem:[#allocation3 + $0xa0] sm:$0xff]
        %v1911 = vld [vmem:[#allocation3 + $0xa8] sm:$0xff]
        %v1912 = vld [vmem:[#allocation3 + $0xb0] sm:$0xff]
        %v1913 = vld [vmem:[#allocation3 + $0xb8] sm:$0xff]
        %v1914 = vld [vmem:[#allocation3 + $0xc0] sm:$0xff]
        %v1915 = vld [vmem:[#allocation3 + $0xc8] sm:$0xff]
        %v1916 = vld [vmem:[#allocation3 + $0xd0] sm:$0xff]
        %v1917 = vld [vmem:[#allocation3 + $0xd8] sm:$0xff]
        %v1918 = vld [vmem:[#allocation3 + $0xe0] sm:$0xff]
        %v1919 = vld [vmem:[#allocation3 + $0xe8] sm:$0xff]
        %v1920 = vld [vmem:[#allocation3 + $0xf0] sm:$0xff]
        %v1921 = vld [vmem:[#allocation3 + $0xf8] sm:$0xff]
        %v1922 = vld [vmem:[%s1] sm:$0xff]
        %v1923 = vld [vmem:[%s1 + $0x8] sm:$0xff]
        %v1924 = vld [vmem:[%s1 + $0x10] sm:$0xff]
        %v1925 = vld [vmem:[%s1 + $0x18] sm:$0xff]
        %v1926 = vld [vmem:[%s1 + $0x20] sm:$0xf]
        %v1927 = vld [vmem:[%s2] sm:$0x1]
        %v1929 = vlaneseq
        %v1930 = vshrl.u32 %v1929, 7
        %v1931 = vsub.s32 0, %v1930
        %v1932 = vrot.slane %v1927, %v1931
        %vm1934 = vcmask 293888
        %v1936 = vsel %vm1934, %v1890, 0
        %v1939 = vsel %vm1934, %v1891, 0
        %v1942 = vsel %vm1934, %v1892, 0
        %v1945 = vsel %vm1934, %v1893, 0
        %v1948 = vsel %vm1934, %v1894, 0
        %v1951 = vsel %vm1934, %v1895, 0
        %v1954 = vsel %vm1934, %v1896, 0
        %v1957 = vsel %vm1934, %v1897, 0
        %v1960 = vsel %vm1934, %v1898, 0
        %v1963 = vsel %vm1934, %v1899, 0
        %v1966 = vsel %vm1934, %v1900, 0
        %v1969 = vsel %vm1934, %v1901, 0
        %v1972 = vsel %vm1934, %v1902, 0
        %v1975 = vsel %vm1934, %v1903, 0
        %v1978 = vsel %vm1934, %v1904, 0
        %v1981 = vsel %vm1934, %v1905, 0
        %v1984 = vsel %vm1934, %v1906, 0
        %v1987 = vsel %vm1934, %v1907, 0
        %v1990 = vsel %vm1934, %v1908, 0
        %v1993 = vsel %vm1934, %v1909, 0
        %v1996 = vsel %vm1934, %v1910, 0
        %v1999 = vsel %vm1934, %v1911, 0
        %v2002 = vsel %vm1934, %v1912, 0
        %v2005 = vsel %vm1934, %v1913, 0
        %v2008 = vsel %vm1934, %v1914, 0
        %v2011 = vsel %vm1934, %v1915, 0
        %v2014 = vsel %vm1934, %v1916, 0
        %v2017 = vsel %vm1934, %v1917, 0
        %v2020 = vsel %vm1934, %v1918, 0
        %v2023 = vsel %vm1934, %v1919, 0
        %v2026 = vsel %vm1934, %v1920, 0
        %v2029 = vsel %vm1934, %v1921, 0
        %vm2031 = vcmask 1043456
        %v2033 = vsel %vm2031, %v1926, 0
        %2035 = vmatprep.subr.mxu0 0.0
        %2036 = vmatpush1.msra.mxu0 %v1922
        %2037 = vmatprep.subr.mxu0 0.0
        %2038 = vmatpush1.msra.mxu0 %v1923
        %2039 = vmatprep.subr.mxu0 0.0
        %2040 = vmatpush1.msra.mxu0 %v1924
        %2041 = vmatprep.subr.mxu0 0.0
        %2042 = vmatpush1.msra.mxu0 %v1925
        %2043 = vmatprep.subr.mxu0 0.0
        %2044 = vmatpush1.msra.mxu0 %v2033
        %2045 = vmatprep.subr.mxu0 0.0
        %2046 = vmatpush1.msra.mxu0 0.0
        %2047 = vmatprep.subr.mxu0 0.0
        %2048 = vmatpush1.msra.mxu0 0.0
        %2049 = vmatprep.subr.mxu0 0.0
        %2050 = vmatpush1.msra.mxu0 0.0
        %2051 = vmatprep.subr.mxu0 0.0
        %2052 = vmatpush1.msra.mxu0 0.0
        %2053 = vmatprep.subr.mxu0 0.0
        %2054 = vmatpush1.msra.mxu0 0.0
        %2055 = vmatprep.subr.mxu0 0.0
        %2056 = vmatpush1.msra.mxu0 0.0
        %2057 = vmatprep.subr.mxu0 0.0
        %2058 = vmatpush1.msra.mxu0 0.0
        %2059 = vmatprep.subr.mxu0 0.0
        %2060 = vmatpush1.msra.mxu0 0.0
        %2061 = vmatprep.subr.mxu0 0.0
        %2062 = vmatpush1.msra.mxu0 0.0
        %2063 = vmatprep.subr.mxu0 0.0
        %2064 = vmatpush1.msra.mxu0 0.0
        %2065 = vmatprep.subr.mxu0 0.0
        %2066 = vmatpush1.msra.mxu0 0.0
        %2067 = vmatprep.subr.mxu0 0.0
        %2068 = vmatpush1.msra.mxu0 0.0
        %2069 = vmatprep.subr.mxu0 0.0
        %2070 = vmatpush1.msra.mxu0 0.0
        %2071 = vmatprep.subr.mxu0 0.0
        %2072 = vmatpush1.msra.mxu0 0.0
        %2073 = vmatprep.subr.mxu0 0.0
        %2074 = vmatpush1.msra.mxu0 0.0
        %2075 = vmatprep.subr.mxu0 0.0
        %2076 = vmatpush1.msra.mxu0 0.0
        %2077 = vmatprep.subr.mxu0 0.0
        %2078 = vmatpush1.msra.mxu0 0.0
        %2079 = vmatprep.subr.mxu0 0.0
        %2080 = vmatpush1.msra.mxu0 0.0
        %2081 = vmatprep.subr.mxu0 0.0
        %2082 = vmatpush1.msra.mxu0 0.0
        %2083 = vmatprep.subr.mxu0 0.0
        %2084 = vmatpush1.msra.mxu0 0.0
        %2085 = vmatprep.subr.mxu0 0.0
        %2086 = vmatpush1.msra.mxu0 0.0
        %2087 = vmatprep.subr.mxu0 0.0
        %2088 = vmatpush1.msra.mxu0 0.0
        %2089 = vmatprep.subr.mxu0 0.0
        %2090 = vmatpush1.msra.mxu0 0.0
        %2091 = vmatprep.subr.mxu0 0.0
        %2092 = vmatpush1.msra.mxu0 0.0
        %2093 = vmatprep.subr.mxu0 0.0
        %2094 = vmatpush1.msra.mxu0 0.0
        %2095 = vmatprep.subr.mxu0 0.0
        %2096 = vmatpush1.msra.mxu0 0.0
        %2097 = vmatprep.subr.mxu0 0.0
        %2098 = vmatpush1.msra.mxu0 0.0
        %2099 = vmatprep.mubr.f32.mxu0 0.0
        %2100 = vmatmul.mubr.f32.gmra.mrb[0].mxu0 %v1936
        %v2101 = vpop.f32.mrb[0].mxu0
        %v2102 = vadd.f32 %v1932, %v2101
        %v2103 = vpop.f32.mrb[0].mxu0
        %2104 = vmatprep.mubr.f32.mxu0 0.0
        %2105 = vmatmul.mubr.f32.gmra.mrb[0].mxu0 %v1939
        %v2106 = vpop.f32.mrb[0].mxu0
        %v2107 = vadd.f32 %v1932, %v2106
        %v2108 = vpop.f32.mrb[0].mxu0
        %2109 = vmatprep.mubr.f32.mxu0 0.0
        %2110 = vmatmul.mubr.f32.gmra.mrb[0].mxu0 %v1942
        %v2111 = vpop.f32.mrb[0].mxu0
        %v2112 = vadd.f32 %v1932, %v2111
        %v2113 = vpop.f32.mrb[0].mxu0
        %2114 = vmatprep.mubr.f32.mxu0 0.0
        %2115 = vmatmul.mubr.f32.gmra.mrb[0].mxu0 %v1945
        %v2116 = vpop.f32.mrb[0].mxu0
        %v2117 = vadd.f32 %v1932, %v2116
        %v2118 = vpop.f32.mrb[0].mxu0
        %2119 = vmatprep.mubr.f32.mxu0 0.0
        %2120 = vmatmul.mubr.f32.gmra.mrb[0].mxu0 %v1948
        %v2121 = vpop.f32.mrb[0].mxu0
        %v2122 = vadd.f32 %v1932, %v2121
        %v2123 = vpop.f32.mrb[0].mxu0
        %2124 = vmatprep.mubr.f32.mxu0 0.0
        %2125 = vmatmul.mubr.f32.gmra.mrb[0].mxu0 %v1951
        %v2126 = vpop.f32.mrb[0].mxu0
        %v2127 = vadd.f32 %v1932, %v2126
        %v2128 = vpop.f32.mrb[0].mxu0
        %2129 = vmatprep.mubr.f32.mxu0 0.0
        %2130 = vmatmul.mubr.f32.gmra.mrb[0].mxu0 %v1954
        %v2131 = vpop.f32.mrb[0].mxu0
        %v2132 = vadd.f32 %v1932, %v2131
        %v2133 = vpop.f32.mrb[0].mxu0
        %2134 = vmatprep.mubr.f32.mxu0 0.0
        %2135 = vmatmul.mubr.f32.gmra.mrb[0].mxu0 %v1957
        %v2136 = vpop.f32.mrb[0].mxu0
        %v2137 = vadd.f32 %v1932, %v2136
        %v2138 = vpop.f32.mrb[0].mxu0
        %2139 = vmatprep.mubr.f32.mxu0 0.0
        %2140 = vmatmul.mubr.f32.gmra.mrb[0].mxu0 %v1960
        %v2141 = vpop.f32.mrb[0].mxu0
        %v2142 = vadd.f32 %v1932, %v2141
        %v2143 = vpop.f32.mrb[0].mxu0
        %2144 = vmatprep.mubr.f32.mxu0 0.0
        %2145 = vmatmul.mubr.f32.gmra.mrb[0].mxu0 %v1963
        %v2146 = vpop.f32.mrb[0].mxu0
        %v2147 = vadd.f32 %v1932, %v2146
        %v2148 = vpop.f32.mrb[0].mxu0
        %2149 = vmatprep.mubr.f32.mxu0 0.0
        %2150 = vmatmul.mubr.f32.gmra.mrb[0].mxu0 %v1966
        %v2151 = vpop.f32.mrb[0].mxu0
        %v2152 = vadd.f32 %v1932, %v2151
        %v2153 = vpop.f32.mrb[0].mxu0
        %2154 = vmatprep.mubr.f32.mxu0 0.0
        %2155 = vmatmul.mubr.f32.gmra.mrb[0].mxu0 %v1969
        %v2156 = vpop.f32.mrb[0].mxu0
        %v2157 = vadd.f32 %v1932, %v2156
        %v2158 = vpop.f32.mrb[0].mxu0
        %2159 = vmatprep.mubr.f32.mxu0 0.0
        %2160 = vmatmul.mubr.f32.gmra.mrb[0].mxu0 %v1972
        %v2161 = vpop.f32.mrb[0].mxu0
        %v2162 = vadd.f32 %v1932, %v2161
        %v2163 = vpop.f32.mrb[0].mxu0
        %2164 = vmatprep.mubr.f32.mxu0 0.0
        %2165 = vmatmul.mubr.f32.gmra.mrb[0].mxu0 %v1975
        %v2166 = vpop.f32.mrb[0].mxu0
        %v2167 = vadd.f32 %v1932, %v2166
        %v2168 = vpop.f32.mrb[0].mxu0
        %2169 = vmatprep.mubr.f32.mxu0 0.0
        %2170 = vmatmul.mubr.f32.gmra.mrb[0].mxu0 %v1978
        %v2171 = vpop.f32.mrb[0].mxu0
        %v2172 = vadd.f32 %v1932, %v2171
        %v2173 = vpop.f32.mrb[0].mxu0
        %2174 = vmatprep.mubr.f32.mxu0 0.0
        %2175 = vmatmul.mubr.f32.gmra.mrb[0].mxu0 %v1981
        %v2176 = vpop.f32.mrb[0].mxu0
        %v2177 = vadd.f32 %v1932, %v2176
        %v2178 = vpop.f32.mrb[0].mxu0
        %2179 = vmatprep.mubr.f32.mxu0 0.0
        %2180 = vmatmul.mubr.f32.gmra.mrb[0].mxu0 %v1984
        %v2181 = vpop.f32.mrb[0].mxu0
        %v2182 = vadd.f32 %v1932, %v2181
        %v2183 = vpop.f32.mrb[0].mxu0
        %2184 = vmatprep.mubr.f32.mxu0 0.0
        %2185 = vmatmul.mubr.f32.gmra.mrb[0].mxu0 %v1987
        %v2186 = vpop.f32.mrb[0].mxu0
        %v2187 = vadd.f32 %v1932, %v2186
        %v2188 = vpop.f32.mrb[0].mxu0
        %2189 = vmatprep.mubr.f32.mxu0 0.0
        %2190 = vmatmul.mubr.f32.gmra.mrb[0].mxu0 %v1990
        %v2191 = vpop.f32.mrb[0].mxu0
        %v2192 = vadd.f32 %v1932, %v2191
        %v2193 = vpop.f32.mrb[0].mxu0
        %2194 = vmatprep.mubr.f32.mxu0 0.0
        %2195 = vmatmul.mubr.f32.gmra.mrb[0].mxu0 %v1993
        %v2196 = vpop.f32.mrb[0].mxu0
        %v2197 = vadd.f32 %v1932, %v2196
        %v2198 = vpop.f32.mrb[0].mxu0
        %2199 = vmatprep.mubr.f32.mxu0 0.0
        %2200 = vmatmul.mubr.f32.gmra.mrb[0].mxu0 %v1996
        %v2201 = vpop.f32.mrb[0].mxu0
        %v2202 = vadd.f32 %v1932, %v2201
        %v2203 = vpop.f32.mrb[0].mxu0
        %2204 = vmatprep.mubr.f32.mxu0 0.0
        %2205 = vmatmul.mubr.f32.gmra.mrb[0].mxu0 %v1999
        %v2206 = vpop.f32.mrb[0].mxu0
        %v2207 = vadd.f32 %v1932, %v2206
        %v2208 = vpop.f32.mrb[0].mxu0
        %2209 = vmatprep.mubr.f32.mxu0 0.0
        %2210 = vmatmul.mubr.f32.gmra.mrb[0].mxu0 %v2002
        %v2211 = vpop.f32.mrb[0].mxu0
        %v2212 = vadd.f32 %v1932, %v2211
        %v2213 = vpop.f32.mrb[0].mxu0
        %2214 = vmatprep.mubr.f32.mxu0 0.0
        %2215 = vmatmul.mubr.f32.gmra.mrb[0].mxu0 %v2005
        %v2216 = vpop.f32.mrb[0].mxu0
        %v2217 = vadd.f32 %v1932, %v2216
        %v2218 = vpop.f32.mrb[0].mxu0
        %2219 = vmatprep.mubr.f32.mxu0 0.0
        %2220 = vmatmul.mubr.f32.gmra.mrb[0].mxu0 %v2008
        %v2221 = vpop.f32.mrb[0].mxu0
        %v2222 = vadd.f32 %v1932, %v2221
        %v2223 = vpop.f32.mrb[0].mxu0
        %2224 = vmatprep.mubr.f32.mxu0 0.0
        %2225 = vmatmul.mubr.f32.gmra.mrb[0].mxu0 %v2011
        %v2226 = vpop.f32.mrb[0].mxu0
        %v2227 = vadd.f32 %v1932, %v2226
        %v2228 = vpop.f32.mrb[0].mxu0
        %2229 = vmatprep.mubr.f32.mxu0 0.0
        %2230 = vmatmul.mubr.f32.gmra.mrb[0].mxu0 %v2014
        %v2231 = vpop.f32.mrb[0].mxu0
        %v2232 = vadd.f32 %v1932, %v2231
        %v2233 = vpop.f32.mrb[0].mxu0
        %2234 = vmatprep.mubr.f32.mxu0 0.0
        %2235 = vmatmul.mubr.f32.gmra.mrb[0].mxu0 %v2017
        %v2236 = vpop.f32.mrb[0].mxu0
        %v2237 = vadd.f32 %v1932, %v2236
        %v2238 = vpop.f32.mrb[0].mxu0
        %2239 = vmatprep.mubr.f32.mxu0 0.0
        %2240 = vmatmul.mubr.f32.gmra.mrb[0].mxu0 %v2020
        %v2241 = vpop.f32.mrb[0].mxu0
        %v2242 = vadd.f32 %v1932, %v2241
        %v2243 = vpop.f32.mrb[0].mxu0
        %2244 = vmatprep.mubr.f32.mxu0 0.0
        %2245 = vmatmul.mubr.f32.gmra.mrb[0].mxu0 %v2023
        %v2246 = vpop.f32.mrb[0].mxu0
        %v2247 = vadd.f32 %v1932, %v2246
        %v2248 = vpop.f32.mrb[0].mxu0
        %2249 = vmatprep.mubr.f32.mxu0 0.0
        %2250 = vmatmul.mubr.f32.gmra.mrb[0].mxu0 %v2026
        %v2251 = vpop.f32.mrb[0].mxu0
        %v2252 = vadd.f32 %v1932, %v2251
        %v2253 = vpop.f32.mrb[0].mxu0
        %2254 = vmatprep.mubr.f32.mxu0 0.0
        %2255 = vmatmul.mubr.f32.gmra.mrb[0].mxu0 %v2029
        %v2256 = vpop.f32.mrb[0].mxu0
        %v2257 = vadd.f32 %v1932, %v2256
        %v2258 = vpop.f32.mrb[0].mxu0
        %2259 = vdwg.mxu0
        %2260 = vst [vmem:[%s163] sm:$0xff] %v2102
        %2261 = vst [vmem:[%s163 + $0x8] sm:$0xff] %v2107
        %2262 = vst [vmem:[%s163 + $0x10] sm:$0xff] %v2112
        %2263 = vst [vmem:[%s163 + $0x18] sm:$0xff] %v2117
        %2264 = vst [vmem:[%s163 + $0x20] sm:$0xff] %v2122
        %2265 = vst [vmem:[%s163 + $0x28] sm:$0xff] %v2127
        %2266 = vst [vmem:[%s163 + $0x30] sm:$0xff] %v2132
        %2267 = vst [vmem:[%s163 + $0x38] sm:$0xff] %v2137
        %2268 = vst [vmem:[%s163 + $0x40] sm:$0xff] %v2142
        %2269 = vst [vmem:[%s163 + $0x48] sm:$0xff] %v2147
        %2270 = vst [vmem:[%s163 + $0x50] sm:$0xff] %v2152
        %2271 = vst [vmem:[%s163 + $0x58] sm:$0xff] %v2157
        %2272 = vst [vmem:[%s163 + $0x60] sm:$0xff] %v2162
        %2273 = vst [vmem:[%s163 + $0x68] sm:$0xff] %v2167
        %2274 = vst [vmem:[%s163 + $0x70] sm:$0xff] %v2172
        %2275 = vst [vmem:[%s163 + $0x78] sm:$0xff] %v2177
        %2276 = vst [vmem:[%s163 + $0x80] sm:$0xff] %v2182
        %2277 = vst [vmem:[%s163 + $0x88] sm:$0xff] %v2187
        %2278 = vst [vmem:[%s163 + $0x90] sm:$0xff] %v2192
        %2279 = vst [vmem:[%s163 + $0x98] sm:$0xff] %v2197
        %2280 = vst [vmem:[%s163 + $0xa0] sm:$0xff] %v2202
        %2281 = vst [vmem:[%s163 + $0xa8] sm:$0xff] %v2207
        %2282 = vst [vmem:[%s163 + $0xb0] sm:$0xff] %v2212
        %2283 = vst [vmem:[%s163 + $0xb8] sm:$0xff] %v2217
        %2284 = vst [vmem:[%s163 + $0xc0] sm:$0xff] %v2222
        %2285 = vst [vmem:[%s163 + $0xc8] sm:$0xff] %v2227
        %2286 = vst [vmem:[%s163 + $0xd0] sm:$0xff] %v2232
        %2287 = vst [vmem:[%s163 + $0xd8] sm:$0xff] %v2237
        %2288 = vst [vmem:[%s163 + $0xe0] sm:$0xff] %v2242
        %2289 = vst [vmem:[%s163 + $0xe8] sm:$0xff] %v2247
        %2290 = vst [vmem:[%s163 + $0xf0] sm:$0xff] %v2252
        %2291 = vst [vmem:[%s163 + $0xf8] sm:$0xff] %v2257
        %s2292 = sand.u32 %s93, 1
        %s2293 = scalar_lea.sflag [#allocation5], %s2292
        %s2294 = sand.u32 %s93, 1
        %s2295 = smul.addr %s2294, 256
        %s2296 = scalar_lea.vmem [#allocation4], %s2295
        // Predicated region
        $region33: #{tpu_custom_call.1} parent=31 // pred_check
          %p2297 = pneg %p103
        $region34: #{tpu_custom_call.1} parent=31 // pred_check_branch
          %2299 = sbr.rel (%p2297) target = $region36
        $region35: #{tpu_custom_call.1} parent=31 // pred_region
          %s2300 = smul.u32 32, %s17
          %s2302 = ssub.s32 4096, 4096
          %2303 = vsyncadd %s2293, %s2302
          %s2304 = smul.addr %s2300, 128
          %s2305 = scalar_lea.hbm %s3, %s2304
          %s2306 = sshll.u32 %s2296, 4
          %s2307 = int_to_ptr.vmem [resolvable:$true] %s2306
          %2312 = dma.vmem_to_hbm [thread:$0]  %s2307, 4096, %s2305, %s2293, 128, 128, 8
        $region36: #{tpu_custom_call.1} parent=31 // pred_fallthru
          _
      $region32: #{tpu_custom_call.1} parent=5 // pred_fallthru
        _
      %p2313 = scmp.le.s32.totalorder 2, %s12
      // Predicated region
      $region37: #{tpu_custom_call.1} parent=5 // pred_check
        %p2314 = pneg %p2313
      $region38: #{tpu_custom_call.1} parent=5 // pred_check_branch
        %2316 = sbr.rel (%p2314) target = $region40
      $region39: #{tpu_custom_call.1} parent=5 // pred_region
        %s2317 = ssub.s32 %s12, 2
        // Predicated region
        $region41: #{tpu_custom_call.1} parent=39 // pred_check
          %p2318 = pneg %p109
        $region42: #{tpu_custom_call.1} parent=39 // pred_check_branch
          %2320 = sbr.rel (%p2318) target = $region44
        $region43: #{tpu_custom_call.1} parent=39 // pred_region
          %s2321 = sand.u32 %s94, 1
          %s2322 = scalar_lea.sflag [#allocation5], %s2321
          %s2323 = sand.u32 %s94, 1
          %s2324 = smul.addr %s2323, 256
          %s2325 = scalar_lea.vmem [#allocation4], %s2324
          %2326 = dma.done %s2322, 4096
        $region44: #{tpu_custom_call.1} parent=39 // pred_fallthru
          _
      $region40: #{tpu_custom_call.1} parent=5 // pred_fallthru
        _
    $region6: #{tpu_custom_call.1} parent=1 // loop_footer
      %s16 = sadd.s32 1, %s12
    $region7: #{tpu_custom_call.1} parent=1 // loop_footer_branch
      %11 = sbr.rel target = $region3
    $region8: #{tpu_custom_call.1} parent=1 // loop_exit
      _
    %2327 = vsyncpa [#allocation5], 1
    %s2328 = scalar_lea.sflag [#allocation5], 1
    %2329 = vsyncpa %s2328, 1

</llo_original>
